<compile_context>
chip_gen: v7x
topology: tpu7x:2x2x1
jax: 0.10.0
libtpu: 0.0.40
codegen_flags: <defaults>
</compile_context>

<pallas_src>
import jax
import jax.numpy as jnp
import numpy as np
from jax import lax
from jax.experimental import pallas as pl
from jax.experimental.pallas import tpu as pltpu


def _rup(x, m=128):
    return ((x + m - 1) // m) * m


def _gru_gates(gi, gh, h_prev, Hp):
    """PyTorch GRUCell gate math on separate input/hidden pre-activations (B, 3*Hp)."""
    r = jax.nn.sigmoid(gi[:, 0:Hp] + gh[:, 0:Hp])
    z = jax.nn.sigmoid(gi[:, Hp:2 * Hp] + gh[:, Hp:2 * Hp])
    n = jnp.tanh(gi[:, 2 * Hp:3 * Hp] + r * gh[:, 2 * Hp:3 * Hp])
    return (1.0 - z) * n + z * h_prev


def attn_decoder_kernel(
    emb_ref,      # (Tc, Bp, Ep)  per-chunk embedded tokens (param_dtype)
    hid_in_ref,   # (L, Bp, Hp)   initial hidden (read once, chunk 0)
    enc_ref,      # (Bp, S, Hp)   encoder outputs, resident f32
    pe_ref,       # (Bp, S, Hp)   precomputed W_e @ enc + b_a (param_dtype)
    mask_ref,     # (Bp, S)       1.0 == padding position (f32)
    attn_wh_ref,  # (Hp, Hp)      W_h^T (hidden part of attn Linear)
    score_v_ref,  # (1, Hp)       score vector v
    wi0e_ref,     # (Ep, 3Hp)     layer-0 W_ih^T, embedded-input rows
    wi0c_ref,     # (Hp, 3Hp)     layer-0 W_ih^T, context-input rows
    wh0_ref,      # (Hp, 3Hp)     layer-0 W_hh^T
    bi0_ref,      # (1, 3Hp)
    bh0_ref,      # (1, 3Hp)
    wi1_ref,      # (Hp, 3Hp)     layer-1 W_ih^T
    wh1_ref,      # (Hp, 3Hp)     layer-1 W_hh^T
    bi1_ref,      # (1, 3Hp)
    bh1_ref,      # (1, 3Hp)
    cat_wh_ref,   # (Hp, Hp)      concat-layer weight, rnn-output rows
    cat_wc_ref,   # (Hp, Hp)      concat-layer weight, context rows
    cat_b_ref,    # (1, Hp)
    co_ref,       # (Tc, Bp, Hp)  per-step tanh(concat(...)) output (f32)
    hid_ref,      # (L, Bp, Hp)   carried hidden state == final hidden output
):
    Tc = emb_ref.shape[0]
    Hp = enc_ref.shape[2]
    wdt = attn_wh_ref.dtype          # MXU / attention-elementwise operand dtype
    f32 = jnp.float32

    @pl.when(pl.program_id(0) == 0)
    def _init():
        hid_ref[...] = hid_in_ref[...]

    def step(t, carry):
        h0, h1 = carry               # (Bp, Hp) f32 each
        emb = emb_ref[t]             # (Bp, Ep)

        # ---- Attention: softmax_s( v . tanh(W_h h1 + W_e enc + b_a) ), masked.
        proj_h = jnp.dot(h1.astype(wdt), attn_wh_ref[...],
                         preferred_element_type=f32)                     # (Bp, Hp)
        feat = jnp.tanh(proj_h.astype(wdt)[:, None, :] + pe_ref[...])    # (Bp, S, Hp)
        energies = jnp.sum((feat * score_v_ref[...][None, :, :]).astype(f32),
                           axis=2)                                        # (Bp, S)
        energies = jnp.where(mask_ref[...] > 0.5, -1e12, energies)       # masked_fill_
        energies = energies - jnp.max(energies, axis=1, keepdims=True)
        exp_e = jnp.exp(energies)
        denom = jnp.sum(exp_e, axis=1, keepdims=True)
        inv = pl.reciprocal(denom, approx=True)          # EUP seed
        inv = inv * (2.0 - denom * inv)                  # one Newton step
        attn_w = exp_e * inv                                              # (Bp, S)

        # ---- context = attn_weights.bmm(encoder_outputs); enc stays f32 resident.
        context = jnp.sum(attn_w[:, :, None] * enc_ref[...], axis=1)     # (Bp, Hp)

        # ---- 2-layer GRU, one time step; separate gi/gh dots, no concats.
        gi0 = (jnp.dot(emb, wi0e_ref[...], preferred_element_type=f32)
               + jnp.dot(context.astype(wdt), wi0c_ref[...],
                         preferred_element_type=f32)
               + bi0_ref[...])
        gh0 = jnp.dot(h0.astype(wdt), wh0_ref[...],
                      preferred_element_type=f32) + bh0_ref[...]
        h0n = _gru_gates(gi0, gh0, h0, Hp)

        gi1 = jnp.dot(h0n.astype(wdt), wi1_ref[...],
                      preferred_element_type=f32) + bi1_ref[...]
        gh1 = jnp.dot(h1.astype(wdt), wh1_ref[...],
                      preferred_element_type=f32) + bh1_ref[...]
        h1n = _gru_gates(gi1, gh1, h1, Hp)

        # ---- co = tanh(concat([rnn_output, context]) W_c + b_c); the vocab
        #      projection is hoisted out of the kernel (done once in XLA).
        co = jnp.tanh(jnp.dot(h1n.astype(wdt), cat_wh_ref[...],
                              preferred_element_type=f32)
                      + jnp.dot(context.astype(wdt), cat_wc_ref[...],
                                preferred_element_type=f32)
                      + cat_b_ref[...])
        co_ref[t] = co
        return (h0n, h1n)

    h0f, h1f = lax.fori_loop(0, Tc, step, (hid_ref[0], hid_ref[1]),
                             unroll=(Tc <= 8))
    hid_ref[0] = h0f
    hid_ref[1] = h1f


# ----------------------------------------------------------------------------- wrapper


def _pad_to(x, shape):
    pads = [(0, t - s) for s, t in zip(x.shape, shape)]
    return jnp.pad(x, pads)


def _const_spec(shape):
    n = len(shape)
    return pl.BlockSpec(shape, lambda c, _n=n: (0,) * _n)


def _pack_params(p, H, E, Hp, Ep, param_dtype):
    """Pad / transpose the PyTorch-layout weights into lane-aligned slabs."""
    f32 = jnp.float32

    def pad2(x, rows, cols):
        return jnp.zeros((rows, cols), f32).at[:x.shape[0], :x.shape[1]].set(x)

    attn_w = p["attn_w"]                               # (H, 2H): [hidden | encoder]
    attn_wh_t = pad2(attn_w[:, :H].T, Hp, Hp)
    score_v = pad2(p["score_w"].reshape(1, H), 1, Hp)

    def gates_t(w_t, rows, rows_p):
        # w_t: (rows, 3H) -> (rows_p, 3*Hp); each gate block lane-aligned at g*Hp.
        out = jnp.zeros((rows_p, 3 * Hp), f32)
        for g in range(3):
            out = out.at[:rows, g * Hp:g * Hp + H].set(w_t[:, g * H:(g + 1) * H])
        return out

    def bias3(b):
        out = jnp.zeros((1, 3 * Hp), f32)
        for g in range(3):
            out = out.at[0, g * Hp:g * Hp + H].set(b[g * H:(g + 1) * H])
        return out

    # Layer 0: input = [embedded (E) | context (H)]; hidden = h0 (H).
    w_ih0_t = p["w_ih0"].T                             # (E+H, 3H)
    wi0e = gates_t(w_ih0_t[:E], E, Ep)
    wi0c = gates_t(w_ih0_t[E:], H, Hp)
    wh0 = gates_t(p["w_hh0"].T, H, Hp)
    bi0, bh0 = bias3(p["b_ih0"]), bias3(p["b_hh0"])
    # Layer 1: input = h0_new (H); hidden = h1 (H).
    wi1 = gates_t(p["w_ih1"].T, H, Hp)
    wh1 = gates_t(p["w_hh1"].T, H, Hp)
    bi1, bh1 = bias3(p["b_ih1"]), bias3(p["b_hh1"])

    cat_w_t = p["cat_w"].T                             # (2H, H): rows [rnn_output | context]
    cat_wh = pad2(cat_w_t[:H], Hp, Hp)
    cat_wc = pad2(cat_w_t[H:], Hp, Hp)
    cat_b = pad2(p["cat_b"].reshape(1, H), 1, Hp)

    mm = lambda w: w.astype(param_dtype)               # only MXU / attn-elementwise operands
    return (mm(attn_wh_t), mm(score_v),
            mm(wi0e), mm(wi0c), mm(wh0), bi0, bh0,
            mm(wi1), mm(wh1), bi1, bh1,
            mm(cat_wh), mm(cat_wc), cat_b)


def attn_decoder_decode(params, tokens, last_hidden, encoder_outputs, seq_mask,
                        param_dtype=jnp.float32, t_chunk=None):
    """T sequential applications of AttnDecoderRNN.forward in ONE pallas_call.

    tokens: (T, B) int32.  Returns (logits (T, B, O), final hidden (L, B, H)).
    The decode loop runs inside the kernel (lax.fori_loop); the grid only chunks T
    (default: a single grid point).  The vocab projection runs outside the kernel.
    """
    T, B = tokens.shape
    L, _, H = last_hidden.shape
    assert L == 2, "kernel specialized to the module default n_layers=2"
    _, S, _ = encoder_outputs.shape
    E = params["embedding"].shape[1]
    Hp, Ep = _rup(H), _rup(E)
    Bp = _rup(B, 8)                                    # fill f32 sublanes

    if t_chunk is None:
        t_chunk = T                                    # single grid point
    assert T % t_chunk == 0, "t_chunk must divide T"
    n_chunks = T // t_chunk

    packed = _pack_params(params, H, E, Hp, Ep, param_dtype)

    # nn.Embedding (padding_idx=0) + eval-mode dropout (identity), gathered for all T.
    emb = jnp.take(params["embedding"], tokens.reshape(-1), axis=0).reshape(T, B, E)
    emb_p = _pad_to(emb, (T, Bp, Ep)).astype(param_dtype)
    hid_p = _pad_to(last_hidden.astype(jnp.float32), (L, Bp, Hp))
    enc_p = _pad_to(encoder_outputs.astype(jnp.float32), (Bp, S, Hp))     # f32 resident
    # Step-invariant encoder projection, hoisted out of the decode loop.
    pe = jnp.einsum("bsh,oh->bso", encoder_outputs, params["attn_w"][:, H:]) + params["attn_b"]
    pe_p = _pad_to(pe, (Bp, S, Hp)).astype(param_dtype)
    mask_p = _pad_to(seq_mask.astype(jnp.float32), (Bp, S))

    in_arrays = (emb_p, hid_p, enc_p, pe_p, mask_p) + packed
    in_specs = [pl.BlockSpec((t_chunk, Bp, Ep), lambda c: (c, 0, 0))]     # per-chunk tokens
    in_specs += [_const_spec(a.shape) for a in in_arrays[1:]]             # resident in VMEM

    out_specs = (pl.BlockSpec((t_chunk, Bp, Hp), lambda c: (c, 0, 0)),    # lane-dense co
                 _const_spec((L, Bp, Hp)))                                # carried hidden
    out_shape = (jax.ShapeDtypeStruct((T, Bp, Hp), jnp.float32),
                 jax.ShapeDtypeStruct((L, Bp, Hp), jnp.float32))

    co, hidden = pl.pallas_call(
        attn_decoder_kernel,
        grid=(n_chunks,),
        in_specs=in_specs,
        out_specs=out_specs,
        out_shape=out_shape,
        compiler_params=pltpu.CompilerParams(
            dimension_semantics=("arbitrary",),        # recurrence over decode chunks
            vmem_limit_bytes=32 * 1024 * 1024,         # comfortable everywhere (v5e..v7x)
        ),
    )(*in_arrays)

    # Hoisted vocab projection: one batched (T*B, H) x (H, O) matmul in plain XLA.
    co = co[:, :B, :H]
    logits = jnp.einsum("tbh,oh->tbo", co, params["out_w"]) + params["out_b"]
    return logits, hidden[:, :B, :H]


def attn_decoder_forward(params, input_seq, last_hidden, encoder_outputs, seq_mask,
                         param_dtype=jnp.float32):
    """Exact module forward (single decode step); same kernel, T=1."""
    logits, hidden = attn_decoder_decode(params, input_seq[None, :], last_hidden,
                                         encoder_outputs, seq_mask, param_dtype)
    return logits[0], hidden


# ----------------------------------------------------------------------------- reference


def init_params(key, hidden_size, embedding_size, input_size, output_size):
    H, E = hidden_size, embedding_size
    ks = jax.random.split(key, 16)

    def w(k, shape, scale=0.1):
        return scale * jax.random.normal(k, shape, dtype=jnp.float32)

    emb = w(ks[0], (input_size, E)).at[0].set(0.0)      # padding_idx=0
    return dict(
        embedding=emb,
        attn_w=w(ks[1], (H, 2 * H)), attn_b=w(ks[2], (H,)),
        score_w=w(ks[3], (1, H)),
        w_ih0=w(ks[4], (3 * H, E + H)), w_hh0=w(ks[5], (3 * H, H)),
        b_ih0=w(ks[6], (3 * H,)), b_hh0=w(ks[7], (3 * H,)),
        w_ih1=w(ks[8], (3 * H, H)), w_hh1=w(ks[9], (3 * H, H)),
        b_ih1=w(ks[10], (3 * H,)), b_hh1=w(ks[11], (3 * H,)),
        cat_w=w(ks[12], (H, 2 * H)), cat_b=w(ks[13], (H,)),
        out_w=w(ks[14], (output_size, H)), out_b=w(ks[15], (output_size,)),
    )


def reference_forward(params, input_seq, last_hidden, encoder_outputs, seq_mask):
    # Pure-JAX reference replicating the PyTorch forward (eval mode).
    H = last_hidden.shape[-1]
    B, S, _ = encoder_outputs.shape
    emb = jnp.take(params["embedding"], input_seq, axis=0)
    h1 = last_hidden[-1]
    energy_in = jnp.concatenate(
        [jnp.broadcast_to(h1[:, None, :], (B, S, H)), encoder_outputs], axis=2
    ).reshape(B * S, 2 * H)
    feat = jnp.tanh(energy_in @ params["attn_w"].T + params["attn_b"])
    e = (feat @ params["score_w"].T).reshape(B, S)
    e = jnp.where(seq_mask > 0.5, -1e12, e)
    a = jax.nn.softmax(e, axis=1)
    context = jnp.einsum("bs,bsh->bh", a, encoder_outputs)

    def cell(x, h, w_ih, w_hh, b_ih, b_hh):
        gi = x @ w_ih.T + b_ih
        gh = h @ w_hh.T + b_hh
        i_r, i_z, i_n = jnp.split(gi, 3, axis=1)
        h_r, h_z, h_n = jnp.split(gh, 3, axis=1)
        r = jax.nn.sigmoid(i_r + h_r)
        z = jax.nn.sigmoid(i_z + h_z)
        n = jnp.tanh(i_n + r * h_n)
        return (1.0 - z) * n + z * h

    h0n = cell(jnp.concatenate([emb, context], 1), last_hidden[0],
               params["w_ih0"], params["w_hh0"], params["b_ih0"], params["b_hh0"])
    h1n = cell(h0n, last_hidden[1],
               params["w_ih1"], params["w_hh1"], params["b_ih1"], params["b_hh1"])
    co = jnp.tanh(jnp.concatenate([h1n, context], 1) @ params["cat_w"].T + params["cat_b"])
    out = co @ params["out_w"].T + params["out_b"]
    return out, jnp.stack([h0n, h1n], axis=0)


def reference_decode(params, tokens, last_hidden, encoder_outputs, seq_mask):
    hid = last_hidden
    outs = []
    for t in range(tokens.shape[0]):
        o, hid = reference_forward(params, tokens[t], hid, encoder_outputs, seq_mask)
        outs.append(o)
    return jnp.stack(outs, axis=0), hid


if __name__ == "__main__":
    hidden_size, embedding_size, input_size, output_size = 32, 32, 30, 20
    B, S, n_layers, T = 2, 8, 2, 4

    key = jax.random.PRNGKey(0)
    kp, k1, k2, k3 = jax.random.split(key, 4)
    params = init_params(kp, hidden_size, embedding_size, input_size, output_size)

    tokens = jax.random.randint(k1, (T, B), 1, input_size)
    last_hidden = 0.1 * jax.random.normal(k2, (n_layers, B, hidden_size), jnp.float32)
    encoder_outputs = 0.1 * jax.random.normal(k3, (B, S, hidden_size), jnp.float32)
    seq_mask = jnp.zeros((B, S), jnp.float32)
    seq_mask = seq_mask.at[0, 6:].set(1.0).at[1, 5:].set(1.0)   # 1.0 == pad position

    # --- single-step forward (module semantics) ---
    out1, hid1 = attn_decoder_forward(params, tokens[0], last_hidden,
                                      encoder_outputs, seq_mask)
    jax.block_until_ready((out1, hid1))
    ref_out1, ref_hid1 = reference_forward(params, tokens[0], last_hidden,
                                           encoder_outputs, seq_mask)
    assert out1.shape == (B, output_size) and hid1.shape == (n_layers, B, hidden_size)
    assert np.allclose(np.asarray(out1), np.asarray(ref_out1), rtol=5e-4, atol=5e-4)
    assert np.allclose(np.asarray(hid1), np.asarray(ref_hid1), rtol=5e-4, atol=5e-4)

    ref_outs, ref_hid = reference_decode(params, tokens, last_hidden,
                                         encoder_outputs, seq_mask)

    # --- fused T-step decode: ONE grid point, in-kernel fori_loop over steps ---
    outs, hid = attn_decoder_decode(params, tokens, last_hidden, encoder_outputs, seq_mask)
    jax.block_until_ready((outs, hid))
    assert outs.shape == (T, B, output_size)
    assert np.allclose(np.asarray(outs), np.asarray(ref_outs), rtol=5e-4, atol=5e-4)
    assert np.allclose(np.asarray(hid), np.asarray(ref_hid), rtol=5e-4, atol=5e-4)

    # --- chunked grid over T (hidden carried as resident accumulator across chunks) ---
    outs_c, hid_c = attn_decoder_decode(params, tokens, last_hidden, encoder_outputs,
                                        seq_mask, t_chunk=2)
    jax.block_until_ready((outs_c, hid_c))
    assert np.allclose(np.asarray(outs_c), np.asarray(ref_outs), rtol=5e-4, atol=5e-4)
    assert np.allclose(np.asarray(hid_c), np.asarray(ref_hid), rtol=5e-4, atol=5e-4)

    # --- bf16 MXU/attention-elementwise variant (enc, biases, softmax stay f32) ---
    outs_bf, hid_bf = attn_decoder_decode(params, tokens, last_hidden, encoder_outputs,
                                          seq_mask, param_dtype=jnp.bfloat16)
    jax.block_until_ready((outs_bf, hid_bf))
    assert bool(jnp.all(jnp.isfinite(outs_bf))) and bool(jnp.all(jnp.isfinite(hid_bf)))
    assert np.allclose(np.asarray(outs_bf), np.asarray(ref_outs), rtol=3e-2, atol=3e-2)
    assert np.allclose(np.asarray(hid_bf), np.asarray(ref_hid), rtol=3e-2, atol=3e-2)

    print("KERNEL_OK")
</pallas_src>

<mosaic_0001>
module attributes {stable_mosaic.version = 11 : i64} {
  func.func @attn_decoder_kernel(%arg0: i32, %arg1: memref<1x8x128xf32, #tpu.memory_space<vmem>>, %arg2: memref<2x8x128xf32, #tpu.memory_space<vmem>>, %arg3: memref<8x8x128xf32, #tpu.memory_space<vmem>>, %arg4: memref<8x8x128xf32, #tpu.memory_space<vmem>>, %arg5: memref<8x8xf32, #tpu.memory_space<vmem>>, %arg6: memref<128x128xf32, #tpu.memory_space<vmem>>, %arg7: memref<1x128xf32, #tpu.memory_space<vmem>>, %arg8: memref<128x384xf32, #tpu.memory_space<vmem>>, %arg9: memref<128x384xf32, #tpu.memory_space<vmem>>, %arg10: memref<128x384xf32, #tpu.memory_space<vmem>>, %arg11: memref<1x384xf32, #tpu.memory_space<vmem>>, %arg12: memref<1x384xf32, #tpu.memory_space<vmem>>, %arg13: memref<128x384xf32, #tpu.memory_space<vmem>>, %arg14: memref<128x384xf32, #tpu.memory_space<vmem>>, %arg15: memref<1x384xf32, #tpu.memory_space<vmem>>, %arg16: memref<1x384xf32, #tpu.memory_space<vmem>>, %arg17: memref<128x128xf32, #tpu.memory_space<vmem>>, %arg18: memref<128x128xf32, #tpu.memory_space<vmem>>, %arg19: memref<1x128xf32, #tpu.memory_space<vmem>>, %arg20: memref<1x8x128xf32, #tpu.memory_space<vmem>>, %arg21: memref<2x8x128xf32, #tpu.memory_space<vmem>>) attributes {dimension_semantics = [#tpu.dimension_semantics<arbitrary>], iteration_bounds = array<i64: 1>, scalar_prefetch = 0 : i64, scratch_operands = 0 : i64, tpu.core_type = #tpu.core_type<tc>, window_params = [{transform_indices = @transform_0, window_bounds = array<i64: 1, 8, 128>}, {pipeline_mode = #tpu.pipeline_mode<synchronous>, transform_indices = @transform_1, window_bounds = array<i64: 2, 8, 128>}, {pipeline_mode = #tpu.pipeline_mode<synchronous>, transform_indices = @transform_2, window_bounds = array<i64: 8, 8, 128>}, {pipeline_mode = #tpu.pipeline_mode<synchronous>, transform_indices = @transform_3, window_bounds = array<i64: 8, 8, 128>}, {pipeline_mode = #tpu.pipeline_mode<synchronous>, transform_indices = @transform_4, window_bounds = array<i64: 8, 8>}, {pipeline_mode = #tpu.pipeline_mode<synchronous>, transform_indices = @transform_5, window_bounds = array<i64: 128, 128>}, {pipeline_mode = #tpu.pipeline_mode<synchronous>, transform_indices = @transform_6, window_bounds = array<i64: 1, 128>}, {pipeline_mode = #tpu.pipeline_mode<synchronous>, transform_indices = @transform_7, window_bounds = array<i64: 128, 384>}, {pipeline_mode = #tpu.pipeline_mode<synchronous>, transform_indices = @transform_8, window_bounds = array<i64: 128, 384>}, {pipeline_mode = #tpu.pipeline_mode<synchronous>, transform_indices = @transform_9, window_bounds = array<i64: 128, 384>}, {pipeline_mode = #tpu.pipeline_mode<synchronous>, transform_indices = @transform_10, window_bounds = array<i64: 1, 384>}, {pipeline_mode = #tpu.pipeline_mode<synchronous>, transform_indices = @transform_11, window_bounds = array<i64: 1, 384>}, {pipeline_mode = #tpu.pipeline_mode<synchronous>, transform_indices = @transform_12, window_bounds = array<i64: 128, 384>}, {pipeline_mode = #tpu.pipeline_mode<synchronous>, transform_indices = @transform_13, window_bounds = array<i64: 128, 384>}, {pipeline_mode = #tpu.pipeline_mode<synchronous>, transform_indices = @transform_14, window_bounds = array<i64: 1, 384>}, {pipeline_mode = #tpu.pipeline_mode<synchronous>, transform_indices = @transform_15, window_bounds = array<i64: 1, 384>}, {pipeline_mode = #tpu.pipeline_mode<synchronous>, transform_indices = @transform_16, window_bounds = array<i64: 128, 128>}, {pipeline_mode = #tpu.pipeline_mode<synchronous>, transform_indices = @transform_17, window_bounds = array<i64: 128, 128>}, {pipeline_mode = #tpu.pipeline_mode<synchronous>, transform_indices = @transform_18, window_bounds = array<i64: 1, 128>}, {transform_indices = @transform_19, window_bounds = array<i64: 1, 8, 128>}, {pipeline_mode = #tpu.pipeline_mode<synchronous>, transform_indices = @transform_20, window_bounds = array<i64: 2, 8, 128>}]} {
    %c0_i32 = arith.constant 0 : i32
    %0 = arith.cmpi eq, %arg0, %c0_i32 : i32
    %1 = arith.extui %0 : i1 to i32
    %c0_i32_0 = arith.constant 0 : i32
    %2 = arith.cmpi ne, %1, %c0_i32_0 : i32
    scf.if %2 {
      %c0_72 = arith.constant 0 : index
      %c0_73 = arith.constant 0 : index
      %c0_74 = arith.constant 0 : index
      %140 = vector.load %arg2[%c0_72, %c0_73, %c0_74] : memref<2x8x128xf32, #tpu.memory_space<vmem>>, vector<2x8x128xf32>
      %c0_75 = arith.constant 0 : index
      %c0_76 = arith.constant 0 : index
      %c0_77 = arith.constant 0 : index
      %141 = vector.load %arg21[%c0_75, %c0_76, %c0_77] : memref<2x8x128xf32, #tpu.memory_space<vmem>>, vector<2x8x128xf32>
      tpu.vector_store %arg21[%c0_75, %c0_76, %c0_77], %140 {strides = array<i32>} : memref<2x8x128xf32, #tpu.memory_space<vmem>>, vector<2x8x128xf32>,
    } else {
    }
    %c0 = arith.constant 0 : index
    %c0_1 = arith.constant 0 : index
    %c0_2 = arith.constant 0 : index
    %3 = vector.load %arg21[%c0, %c0_1, %c0_2] : memref<2x8x128xf32, #tpu.memory_space<vmem>>, vector<1x8x128xf32>
    %4 = vector.shape_cast %3 : vector<1x8x128xf32> to vector<8x128xf32>
    %c1 = arith.constant 1 : index
    %c0_3 = arith.constant 0 : index
    %c0_4 = arith.constant 0 : index
    %5 = vector.load %arg21[%c1, %c0_3, %c0_4] : memref<2x8x128xf32, #tpu.memory_space<vmem>>, vector<1x8x128xf32>
    %6 = vector.shape_cast %5 : vector<1x8x128xf32> to vector<8x128xf32>
    %c0_i32_5 = arith.constant 0 : i32
    %7 = arith.index_cast %c0_i32_5 : i32 to index
    %c0_6 = arith.constant 0 : index
    %c0_7 = arith.constant 0 : index
    %8 = vector.load %arg1[%7, %c0_6, %c0_7] : memref<1x8x128xf32, #tpu.memory_space<vmem>>, vector<1x8x128xf32>
    %9 = vector.shape_cast %8 : vector<1x8x128xf32> to vector<8x128xf32>
    %c0_8 = arith.constant 0 : index
    %c0_9 = arith.constant 0 : index
    %10 = vector.load %arg6[%c0_8, %c0_9] : memref<128x128xf32, #tpu.memory_space<vmem>>, vector<128x128xf32>
    %cst = arith.constant dense<0.000000e+00> : vector<8x128xf32>
    %11 = tpu.matmul %6, %10, %cst {dimension_numbers = #tpu.dot_dimension_numbers<[1], [0], [0], [1], [0, 0, 1, 1], [], []>} : vector<8x128xf32>, vector<128x128xf32>, vector<8x128xf32> -> vector<8x128xf32>
    %12 = vector.shape_cast %11 : vector<8x128xf32> to vector<8x1x128xf32>
    %c0_10 = arith.constant 0 : index
    %c0_11 = arith.constant 0 : index
    %c0_12 = arith.constant 0 : index
    %13 = vector.load %arg4[%c0_10, %c0_11, %c0_12] : memref<8x8x128xf32, #tpu.memory_space<vmem>>, vector<8x8x128xf32>
    %14 = vector.broadcast %12 : vector<8x1x128xf32> to vector<8x8x128xf32>
    %15 = arith.addf %14, %13 : vector<8x8x128xf32>
    %16 = math.tanh %15 : vector<8x8x128xf32>
    %c0_13 = arith.constant 0 : index
    %c0_14 = arith.constant 0 : index
    %17 = vector.load %arg7[%c0_13, %c0_14] : memref<1x128xf32, #tpu.memory_space<vmem>>, vector<1x128xf32>
    %18 = vector.shape_cast %17 : vector<1x128xf32> to vector<1x1x128xf32>
    %19 = vector.broadcast %18 : vector<1x1x128xf32> to vector<8x8x128xf32>
    %20 = arith.mulf %16, %19 : vector<8x8x128xf32>
    %cst_15 = arith.constant dense<0.000000e+00> : vector<8x8xf32>
    %21 = vector.multi_reduction <add>, %20, %cst_15 [2] : vector<8x8x128xf32> to vector<8x8xf32>
    %c0_16 = arith.constant 0 : index
    %c0_17 = arith.constant 0 : index
    %22 = vector.load %arg5[%c0_16, %c0_17] : memref<8x8xf32, #tpu.memory_space<vmem>>, vector<8x8xf32>
    %cst_18 = arith.constant 5.000000e-01 : f32
    %23 = vector.broadcast %cst_18 : f32 to vector<8x8xf32>
    %24 = arith.cmpf ogt, %22, %23 : vector<8x8xf32>
    %cst_19 = arith.constant -9.99999995E+11 : f32
    %25 = vector.broadcast %cst_19 : f32 to vector<8x8xf32>
    %26 = arith.select %24, %25, %21 : vector<8x8xi1>, vector<8x8xf32>
    %cst_20 = arith.constant dense<0xFF800000> : vector<8xf32>
    %27 = vector.multi_reduction <maximumf>, %26, %cst_20 [1] : vector<8x8xf32> to vector<8xf32>
    %28 = vector.shape_cast %27 : vector<8xf32> to vector<8x1xf32>
    %29 = vector.broadcast %28 : vector<8x1xf32> to vector<8x8xf32>
    %30 = arith.subf %26, %29 : vector<8x8xf32>
    %31 = math.exp %30 : vector<8x8xf32>
    %cst_21 = arith.constant dense<0.000000e+00> : vector<8xf32>
    %32 = vector.multi_reduction <add>, %31, %cst_21 [1] : vector<8x8xf32> to vector<8xf32>
    %33 = vector.shape_cast %32 : vector<8xf32> to vector<8x1xf32>
    %34 = tpu.reciprocal %33 {approx = true} : vector<8x1xf32> -> vector<8x1xf32>
    %35 = arith.mulf %33, %34 : vector<8x1xf32>
    %cst_22 = arith.constant 2.000000e+00 : f32
    %36 = vector.broadcast %cst_22 : f32 to vector<8x1xf32>
    %37 = arith.subf %36, %35 : vector<8x1xf32>
    %38 = arith.mulf %34, %37 : vector<8x1xf32>
    %39 = vector.broadcast %38 : vector<8x1xf32> to vector<8x8xf32>
    %40 = arith.mulf %31, %39 : vector<8x8xf32>
    %41 = vector.shape_cast %40 : vector<8x8xf32> to vector<8x8x1xf32>
    %c0_23 = arith.constant 0 : index
    %c0_24 = arith.constant 0 : index
    %c0_25 = arith.constant 0 : index
    %42 = vector.load %arg3[%c0_23, %c0_24, %c0_25] : memref<8x8x128xf32, #tpu.memory_space<vmem>>, vector<8x8x128xf32>
    %43 = vector.broadcast %41 : vector<8x8x1xf32> to vector<8x8x128xf32>
    %44 = arith.mulf %43, %42 : vector<8x8x128xf32>
    %cst_26 = arith.constant dense<0.000000e+00> : vector<8x128xf32>
    %45 = vector.multi_reduction <add>, %44, %cst_26 [1] : vector<8x8x128xf32> to vector<8x128xf32>
    %c0_27 = arith.constant 0 : index
    %c0_28 = arith.constant 0 : index
    %46 = vector.load %arg8[%c0_27, %c0_28] : memref<128x384xf32, #tpu.memory_space<vmem>>, vector<128x384xf32>
    %cst_29 = arith.constant dense<0.000000e+00> : vector<8x384xf32>
    %47 = tpu.matmul %9, %46, %cst_29 {dimension_numbers = #tpu.dot_dimension_numbers<[1], [0], [0], [1], [0, 0, 1, 1], [], []>} : vector<8x128xf32>, vector<128x384xf32>, vector<8x384xf32> -> vector<8x384xf32>
    %c0_30 = arith.constant 0 : index
    %c0_31 = arith.constant 0 : index
    %48 = vector.load %arg9[%c0_30, %c0_31] : memref<128x384xf32, #tpu.memory_space<vmem>>, vector<128x384xf32>
    %cst_32 = arith.constant dense<0.000000e+00> : vector<8x384xf32>
    %49 = tpu.matmul %45, %48, %cst_32 {dimension_numbers = #tpu.dot_dimension_numbers<[1], [0], [0], [1], [0, 0, 1, 1], [], []>} : vector<8x128xf32>, vector<128x384xf32>, vector<8x384xf32> -> vector<8x384xf32>
    %50 = arith.addf %47, %49 : vector<8x384xf32>
    %c0_33 = arith.constant 0 : index
    %c0_34 = arith.constant 0 : index
    %51 = vector.load %arg11[%c0_33, %c0_34] : memref<1x384xf32, #tpu.memory_space<vmem>>, vector<1x384xf32>
    %52 = vector.broadcast %51 : vector<1x384xf32> to vector<8x384xf32>
    %53 = arith.addf %50, %52 : vector<8x384xf32>
    %c0_35 = arith.constant 0 : index
    %c0_36 = arith.constant 0 : index
    %54 = vector.load %arg10[%c0_35, %c0_36] : memref<128x384xf32, #tpu.memory_space<vmem>>, vector<128x384xf32>
    %cst_37 = arith.constant dense<0.000000e+00> : vector<8x384xf32>
    %55 = tpu.matmul %4, %54, %cst_37 {dimension_numbers = #tpu.dot_dimension_numbers<[1], [0], [0], [1], [0, 0, 1, 1], [], []>} : vector<8x128xf32>, vector<128x384xf32>, vector<8x384xf32> -> vector<8x384xf32>
    %c0_38 = arith.constant 0 : index
    %c0_39 = arith.constant 0 : index
    %56 = vector.load %arg12[%c0_38, %c0_39] : memref<1x384xf32, #tpu.memory_space<vmem>>, vector<1x384xf32>
    %57 = vector.broadcast %56 : vector<1x384xf32> to vector<8x384xf32>
    %58 = arith.addf %55, %57 : vector<8x384xf32>
    %59 = vector.extract_strided_slice %53 {offsets = [0, 0], sizes = [8, 128], strides = [1, 1]} : vector<8x384xf32> to vector<8x128xf32>
    %60 = vector.extract_strided_slice %58 {offsets = [0, 0], sizes = [8, 128], strides = [1, 1]} : vector<8x384xf32> to vector<8x128xf32>
    %61 = arith.addf %59, %60 : vector<8x128xf32>
    %62 = arith.negf %61 : vector<8x128xf32>
    %63 = math.exp %62 : vector<8x128xf32>
    %cst_40 = arith.constant 1.000000e+00 : f32
    %64 = vector.broadcast %cst_40 : f32 to vector<8x128xf32>
    %65 = arith.addf %64, %63 : vector<8x128xf32>
    %66 = arith.divf %64, %65 : vector<8x128xf32>
    %67 = vector.extract_strided_slice %53 {offsets = [0, 128], sizes = [8, 128], strides = [1, 1]} : vector<8x384xf32> to vector<8x128xf32>
    %68 = vector.extract_strided_slice %58 {offsets = [0, 128], sizes = [8, 128], strides = [1, 1]} : vector<8x384xf32> to vector<8x128xf32>
    %69 = arith.addf %67, %68 : vector<8x128xf32>
    %70 = arith.negf %69 : vector<8x128xf32>
    %71 = math.exp %70 : vector<8x128xf32>
    %cst_41 = arith.constant 1.000000e+00 : f32
    %72 = vector.broadcast %cst_41 : f32 to vector<8x128xf32>
    %73 = arith.addf %72, %71 : vector<8x128xf32>
    %74 = arith.divf %72, %73 : vector<8x128xf32>
    %75 = vector.extract_strided_slice %53 {offsets = [0, 256], sizes = [8, 128], strides = [1, 1]} : vector<8x384xf32> to vector<8x128xf32>
    %76 = vector.extract_strided_slice %58 {offsets = [0, 256], sizes = [8, 128], strides = [1, 1]} : vector<8x384xf32> to vector<8x128xf32>
    %77 = arith.mulf %66, %76 : vector<8x128xf32>
    %78 = arith.addf %75, %77 : vector<8x128xf32>
    %79 = math.tanh %78 : vector<8x128xf32>
    %cst_42 = arith.constant 1.000000e+00 : f32
    %80 = vector.broadcast %cst_42 : f32 to vector<8x128xf32>
    %81 = arith.subf %80, %74 : vector<8x128xf32>
    %82 = arith.mulf %81, %79 : vector<8x128xf32>
    %83 = arith.mulf %74, %4 : vector<8x128xf32>
    %84 = arith.addf %82, %83 : vector<8x128xf32>
    %c0_43 = arith.constant 0 : index
    %c0_44 = arith.constant 0 : index
    %85 = vector.load %arg13[%c0_43, %c0_44] : memref<128x384xf32, #tpu.memory_space<vmem>>, vector<128x384xf32>
    %cst_45 = arith.constant dense<0.000000e+00> : vector<8x384xf32>
    %86 = tpu.matmul %84, %85, %cst_45 {dimension_numbers = #tpu.dot_dimension_numbers<[1], [0], [0], [1], [0, 0, 1, 1], [], []>} : vector<8x128xf32>, vector<128x384xf32>, vector<8x384xf32> -> vector<8x384xf32>
    %c0_46 = arith.constant 0 : index
    %c0_47 = arith.constant 0 : index
    %87 = vector.load %arg15[%c0_46, %c0_47] : memref<1x384xf32, #tpu.memory_space<vmem>>, vector<1x384xf32>
    %88 = vector.broadcast %87 : vector<1x384xf32> to vector<8x384xf32>
    %89 = arith.addf %86, %88 : vector<8x384xf32>
    %c0_48 = arith.constant 0 : index
    %c0_49 = arith.constant 0 : index
    %90 = vector.load %arg14[%c0_48, %c0_49] : memref<128x384xf32, #tpu.memory_space<vmem>>, vector<128x384xf32>
    %cst_50 = arith.constant dense<0.000000e+00> : vector<8x384xf32>
    %91 = tpu.matmul %6, %90, %cst_50 {dimension_numbers = #tpu.dot_dimension_numbers<[1], [0], [0], [1], [0, 0, 1, 1], [], []>} : vector<8x128xf32>, vector<128x384xf32>, vector<8x384xf32> -> vector<8x384xf32>
    %c0_51 = arith.constant 0 : index
    %c0_52 = arith.constant 0 : index
    %92 = vector.load %arg16[%c0_51, %c0_52] : memref<1x384xf32, #tpu.memory_space<vmem>>, vector<1x384xf32>
    %93 = vector.broadcast %92 : vector<1x384xf32> to vector<8x384xf32>
    %94 = arith.addf %91, %93 : vector<8x384xf32>
    %95 = vector.extract_strided_slice %89 {offsets = [0, 0], sizes = [8, 128], strides = [1, 1]} : vector<8x384xf32> to vector<8x128xf32>
    %96 = vector.extract_strided_slice %94 {offsets = [0, 0], sizes = [8, 128], strides = [1, 1]} : vector<8x384xf32> to vector<8x128xf32>
    %97 = arith.addf %95, %96 : vector<8x128xf32>
    %98 = arith.negf %97 : vector<8x128xf32>
    %99 = math.exp %98 : vector<8x128xf32>
    %cst_53 = arith.constant 1.000000e+00 : f32
    %100 = vector.broadcast %cst_53 : f32 to vector<8x128xf32>
    %101 = arith.addf %100, %99 : vector<8x128xf32>
    %102 = arith.divf %100, %101 : vector<8x128xf32>
    %103 = vector.extract_strided_slice %89 {offsets = [0, 128], sizes = [8, 128], strides = [1, 1]} : vector<8x384xf32> to vector<8x128xf32>
    %104 = vector.extract_strided_slice %94 {offsets = [0, 128], sizes = [8, 128], strides = [1, 1]} : vector<8x384xf32> to vector<8x128xf32>
    %105 = arith.addf %103, %104 : vector<8x128xf32>
    %106 = arith.negf %105 : vector<8x128xf32>
    %107 = math.exp %106 : vector<8x128xf32>
    %cst_54 = arith.constant 1.000000e+00 : f32
    %108 = vector.broadcast %cst_54 : f32 to vector<8x128xf32>
    %109 = arith.addf %108, %107 : vector<8x128xf32>
    %110 = arith.divf %108, %109 : vector<8x128xf32>
    %111 = vector.extract_strided_slice %89 {offsets = [0, 256], sizes = [8, 128], strides = [1, 1]} : vector<8x384xf32> to vector<8x128xf32>
    %112 = vector.extract_strided_slice %94 {offsets = [0, 256], sizes = [8, 128], strides = [1, 1]} : vector<8x384xf32> to vector<8x128xf32>
    %113 = arith.mulf %102, %112 : vector<8x128xf32>
    %114 = arith.addf %111, %113 : vector<8x128xf32>
    %115 = math.tanh %114 : vector<8x128xf32>
    %cst_55 = arith.constant 1.000000e+00 : f32
    %116 = vector.broadcast %cst_55 : f32 to vector<8x128xf32>
    %117 = arith.subf %116, %110 : vector<8x128xf32>
    %118 = arith.mulf %117, %115 : vector<8x128xf32>
    %119 = arith.mulf %110, %6 : vector<8x128xf32>
    %120 = arith.addf %118, %119 : vector<8x128xf32>
    %c0_56 = arith.constant 0 : index
    %c0_57 = arith.constant 0 : index
    %121 = vector.load %arg17[%c0_56, %c0_57] : memref<128x128xf32, #tpu.memory_space<vmem>>, vector<128x128xf32>
    %cst_58 = arith.constant dense<0.000000e+00> : vector<8x128xf32>
    %122 = tpu.matmul %120, %121, %cst_58 {dimension_numbers = #tpu.dot_dimension_numbers<[1], [0], [0], [1], [0, 0, 1, 1], [], []>} : vector<8x128xf32>, vector<128x128xf32>, vector<8x128xf32> -> vector<8x128xf32>
    %c0_59 = arith.constant 0 : index
    %c0_60 = arith.constant 0 : index
    %123 = vector.load %arg18[%c0_59, %c0_60] : memref<128x128xf32, #tpu.memory_space<vmem>>, vector<128x128xf32>
    %cst_61 = arith.constant dense<0.000000e+00> : vector<8x128xf32>
    %124 = tpu.matmul %45, %123, %cst_61 {dimension_numbers = #tpu.dot_dimension_numbers<[1], [0], [0], [1], [0, 0, 1, 1], [], []>} : vector<8x128xf32>, vector<128x128xf32>, vector<8x128xf32> -> vector<8x128xf32>
    %125 = arith.addf %122, %124 : vector<8x128xf32>
    %c0_62 = arith.constant 0 : index
    %c0_63 = arith.constant 0 : index
    %126 = vector.load %arg19[%c0_62, %c0_63] : memref<1x128xf32, #tpu.memory_space<vmem>>, vector<1x128xf32>
    %127 = vector.broadcast %126 : vector<1x128xf32> to vector<8x128xf32>
    %128 = arith.addf %125, %127 : vector<8x128xf32>
    %129 = math.tanh %128 : vector<8x128xf32>
    %130 = arith.index_cast %c0_i32_5 : i32 to index
    %c0_64 = arith.constant 0 : index
    %c0_65 = arith.constant 0 : index
    %131 = vector.load %arg20[%130, %c0_64, %c0_65] : memref<1x8x128xf32, #tpu.memory_space<vmem>>, vector<1x8x128xf32>
    %132 = vector.shape_cast %131 : vector<1x8x128xf32> to vector<8x128xf32>
    %133 = vector.shape_cast %129 : vector<8x128xf32> to vector<1x8x128xf32>
    tpu.vector_store %arg20[%130, %c0_64, %c0_65], %133 {strides = array<i32>} : memref<1x8x128xf32, #tpu.memory_space<vmem>>, vector<1x8x128xf32>,
    %c1_i32 = arith.constant 1 : i32
    %c0_66 = arith.constant 0 : index
    %c0_67 = arith.constant 0 : index
    %c0_68 = arith.constant 0 : index
    %134 = vector.load %arg21[%c0_66, %c0_67, %c0_68] : memref<2x8x128xf32, #tpu.memory_space<vmem>>, vector<1x8x128xf32>
    %135 = vector.shape_cast %134 : vector<1x8x128xf32> to vector<8x128xf32>
    %136 = vector.shape_cast %84 : vector<8x128xf32> to vector<1x8x128xf32>
    tpu.vector_store %arg21[%c0_66, %c0_67, %c0_68], %136 {strides = array<i32>} : memref<2x8x128xf32, #tpu.memory_space<vmem>>, vector<1x8x128xf32>,
    %c1_69 = arith.constant 1 : index
    %c0_70 = arith.constant 0 : index
    %c0_71 = arith.constant 0 : index
    %137 = vector.load %arg21[%c1_69, %c0_70, %c0_71] : memref<2x8x128xf32, #tpu.memory_space<vmem>>, vector<1x8x128xf32>
    %138 = vector.shape_cast %137 : vector<1x8x128xf32> to vector<8x128xf32>
    %139 = vector.shape_cast %120 : vector<8x128xf32> to vector<1x8x128xf32>
    tpu.vector_store %arg21[%c1_69, %c0_70, %c0_71], %139 {strides = array<i32>} : memref<2x8x128xf32, #tpu.memory_space<vmem>>, vector<1x8x128xf32>,
    return
  }
  func.func @transform_0(%arg0: i32) -> (i32, i32, i32) {
    %c0_i32 = arith.constant 0 : i32
    %c0_i32_0 = arith.constant 0 : i32
    %c0_i32_1 = arith.constant 0 : i32
    return %arg0, %c0_i32, %c0_i32_0 : i32, i32, i32
  }
  func.func @transform_1(%arg0: i32) -> (i32, i32, i32) {
    %c0_i32 = arith.constant 0 : i32
    %c0_i32_0 = arith.constant 0 : i32
    %c0_i32_1 = arith.constant 0 : i32
    %c0_i32_2 = arith.constant 0 : i32
    return %c0_i32, %c0_i32_0, %c0_i32_1 : i32, i32, i32
  }
  func.func @transform_2(%arg0: i32) -> (i32, i32, i32) {
    %c0_i32 = arith.constant 0 : i32
    %c0_i32_0 = arith.constant 0 : i32
    %c0_i32_1 = arith.constant 0 : i32
    %c0_i32_2 = arith.constant 0 : i32
    return %c0_i32, %c0_i32_0, %c0_i32_1 : i32, i32, i32
  }
  func.func @transform_3(%arg0: i32) -> (i32, i32, i32) {
    %c0_i32 = arith.constant 0 : i32
    %c0_i32_0 = arith.constant 0 : i32
    %c0_i32_1 = arith.constant 0 : i32
    %c0_i32_2 = arith.constant 0 : i32
    return %c0_i32, %c0_i32_0, %c0_i32_1 : i32, i32, i32
  }
  func.func @transform_4(%arg0: i32) -> (i32, i32) {
    %c0_i32 = arith.constant 0 : i32
    %c0_i32_0 = arith.constant 0 : i32
    %c0_i32_1 = arith.constant 0 : i32
    return %c0_i32, %c0_i32_0 : i32, i32
  }
  func.func @transform_5(%arg0: i32) -> (i32, i32) {
    %c0_i32 = arith.constant 0 : i32
    %c0_i32_0 = arith.constant 0 : i32
    %c0_i32_1 = arith.constant 0 : i32
    return %c0_i32, %c0_i32_0 : i32, i32
  }
  func.func @transform_6(%arg0: i32) -> (i32, i32) {
    %c0_i32 = arith.constant 0 : i32
    %c0_i32_0 = arith.constant 0 : i32
    %c0_i32_1 = arith.constant 0 : i32
    return %c0_i32, %c0_i32_0 : i32, i32
  }
  func.func @transform_7(%arg0: i32) -> (i32, i32) {
    %c0_i32 = arith.constant 0 : i32
    %c0_i32_0 = arith.constant 0 : i32
    %c0_i32_1 = arith.constant 0 : i32
    return %c0_i32, %c0_i32_0 : i32, i32
  }
  func.func @transform_8(%arg0: i32) -> (i32, i32) {
    %c0_i32 = arith.constant 0 : i32
    %c0_i32_0 = arith.constant 0 : i32
    %c0_i32_1 = arith.constant 0 : i32
    return %c0_i32, %c0_i32_0 : i32, i32
  }
  func.func @transform_9(%arg0: i32) -> (i32, i32) {
    %c0_i32 = arith.constant 0 : i32
    %c0_i32_0 = arith.constant 0 : i32
    %c0_i32_1 = arith.constant 0 : i32
    return %c0_i32, %c0_i32_0 : i32, i32
  }
  func.func @transform_10(%arg0: i32) -> (i32, i32) {
    %c0_i32 = arith.constant 0 : i32
    %c0_i32_0 = arith.constant 0 : i32
    %c0_i32_1 = arith.constant 0 : i32
    return %c0_i32, %c0_i32_0 : i32, i32
  }
  func.func @transform_11(%arg0: i32) -> (i32, i32) {
    %c0_i32 = arith.constant 0 : i32
    %c0_i32_0 = arith.constant 0 : i32
    %c0_i32_1 = arith.constant 0 : i32
    return %c0_i32, %c0_i32_0 : i32, i32
  }
  func.func @transform_12(%arg0: i32) -> (i32, i32) {
    %c0_i32 = arith.constant 0 : i32
    %c0_i32_0 = arith.constant 0 : i32
    %c0_i32_1 = arith.constant 0 : i32
    return %c0_i32, %c0_i32_0 : i32, i32
  }
  func.func @transform_13(%arg0: i32) -> (i32, i32) {
    %c0_i32 = arith.constant 0 : i32
    %c0_i32_0 = arith.constant 0 : i32
    %c0_i32_1 = arith.constant 0 : i32
    return %c0_i32, %c0_i32_0 : i32, i32
  }
  func.func @transform_14(%arg0: i32) -> (i32, i32) {
    %c0_i32 = arith.constant 0 : i32
    %c0_i32_0 = arith.constant 0 : i32
    %c0_i32_1 = arith.constant 0 : i32
    return %c0_i32, %c0_i32_0 : i32, i32
  }
  func.func @transform_15(%arg0: i32) -> (i32, i32) {
    %c0_i32 = arith.constant 0 : i32
    %c0_i32_0 = arith.constant 0 : i32
    %c0_i32_1 = arith.constant 0 : i32
    return %c0_i32, %c0_i32_0 : i32, i32
  }
  func.func @transform_16(%arg0: i32) -> (i32, i32) {
    %c0_i32 = arith.constant 0 : i32
    %c0_i32_0 = arith.constant 0 : i32
    %c0_i32_1 = arith.constant 0 : i32
    return %c0_i32, %c0_i32_0 : i32, i32
  }
  func.func @transform_17(%arg0: i32) -> (i32, i32) {
    %c0_i32 = arith.constant 0 : i32
    %c0_i32_0 = arith.constant 0 : i32
    %c0_i32_1 = arith.constant 0 : i32
    return %c0_i32, %c0_i32_0 : i32, i32
  }
  func.func @transform_18(%arg0: i32) -> (i32, i32) {
    %c0_i32 = arith.constant 0 : i32
    %c0_i32_0 = arith.constant 0 : i32
    %c0_i32_1 = arith.constant 0 : i32
    return %c0_i32, %c0_i32_0 : i32, i32
  }
  func.func @transform_19(%arg0: i32) -> (i32, i32, i32) {
    %c0_i32 = arith.constant 0 : i32
    %c0_i32_0 = arith.constant 0 : i32
    %c0_i32_1 = arith.constant 0 : i32
    return %arg0, %c0_i32, %c0_i32_0 : i32, i32, i32
  }
  func.func @transform_20(%arg0: i32) -> (i32, i32, i32) {
    %c0_i32 = arith.constant 0 : i32
    %c0_i32_0 = arith.constant 0 : i32
    %c0_i32_1 = arith.constant 0 : i32
    %c0_i32_2 = arith.constant 0 : i32
    return %c0_i32, %c0_i32_0, %c0_i32_1 : i32, i32, i32
  }
}

</mosaic_0001>

<llo_original>
// kernel: tpu_custom_call.1
$region0: #{tpu_custom_call.1}
  #allocation0 [shape = 'u32[]', space=smem, size = 0x4, offset = 0x4, fixed_abs, tag = 'smem constant byte address 0x4 - core index']
  #allocation1 [shape = 'u32[144,128]{1,0:T(1,128)}', space=vmem, size = 0x12000, scoped, tag = 'internal scratch']
  %s0 = inlined_call_operand.hbm [shape: f32[1,8,128], index: 0, kind: input, shape index: {}]
  %s1 = inlined_call_operand.hbm [shape: f32[2,8,128], index: 1, kind: input, shape index: {}]
  %s2 = inlined_call_operand.hbm [shape: f32[8,8,128], index: 2, kind: input, shape index: {}]
  %s3 = inlined_call_operand.hbm [shape: f32[8,8,128], index: 3, kind: input, shape index: {}]
  %s4 = inlined_call_operand.vmem [shape: f32[8,8], index: 4, kind: input, shape index: {}]
  %s5 = inlined_call_operand.hbm [shape: f32[128,128], index: 5, kind: input, shape index: {}]
  %s6 = inlined_call_operand.vmem [shape: f32[1,128], index: 6, kind: input, shape index: {}]
  %s7 = inlined_call_operand.hbm [shape: f32[128,384], index: 7, kind: input, shape index: {}]
  %s8 = inlined_call_operand.hbm [shape: f32[128,384], index: 8, kind: input, shape index: {}]
  %s9 = inlined_call_operand.hbm [shape: f32[128,384], index: 9, kind: input, shape index: {}]
  %s10 = inlined_call_operand.vmem [shape: f32[1,384], index: 10, kind: input, shape index: {}]
  %s11 = inlined_call_operand.vmem [shape: f32[1,384], index: 11, kind: input, shape index: {}]
  %s12 = inlined_call_operand.hbm [shape: f32[128,384], index: 12, kind: input, shape index: {}]
  %s13 = inlined_call_operand.hbm [shape: f32[128,384], index: 13, kind: input, shape index: {}]
  %s14 = inlined_call_operand.vmem [shape: f32[1,384], index: 14, kind: input, shape index: {}]
  %s15 = inlined_call_operand.vmem [shape: f32[1,384], index: 15, kind: input, shape index: {}]
  %s16 = inlined_call_operand.hbm [shape: f32[128,128], index: 16, kind: input, shape index: {}]
  %s17 = inlined_call_operand.hbm [shape: f32[128,128], index: 17, kind: input, shape index: {}]
  %s18 = inlined_call_operand.vmem [shape: f32[1,128], index: 18, kind: input, shape index: {}]
  %s19 = inlined_call_operand.hbm [shape: f32[1,8,128], index: 19, kind: output, shape index: {0}]
  %s20 = inlined_call_operand.hbm [shape: f32[2,8,128], index: 20, kind: output, shape index: {1}]
  %21 = xla_tuple %s19, %s20
  %s22 = sld [smem:[#allocation0]]
  $region146: #{tpu_custom_call.1} parent=0
    _
  %s24 = ssub.s32 1, %s22
  %s25 = scalar_select 0, %s24, %s22
  $region1: #{tpu_custom_call.1} parent=0
    #allocation2 [shape = 'u8[4096]{0}', space=vmem, size = 0x1000, scoped, tag = 'input window, operand 0, single buffered']
    #allocation3 [shape = 's32[1]{0}', space=sflag, size = 0x4, scoped, tag = 'scoped memory for tpu_custom_call.1']
    #allocation4 [shape = 's32[1]{0}', space=sflag, size = 0x4, scoped, tag = 'scoped memory for tpu_custom_call.1']
    #allocation5 [shape = 'u8[8192]{0}', space=vmem, size = 0x2000, scoped, tag = 'input window, operand 1, single buffered']
    #allocation6 [shape = 's32[1]{0}', space=sflag, size = 0x4, scoped, tag = 'scoped memory for tpu_custom_call.1']
    #allocation7 [shape = 'u8[32768]{0}', space=vmem, size = 0x8000, scoped, tag = 'input window, operand 2, single buffered']
    #allocation8 [shape = 'u8[32768]{0}', space=vmem, size = 0x8000, scoped, tag = 'input window, operand 3, single buffered']
    #allocation9 [shape = 's32[1]{0}', space=sflag, size = 0x4, scoped, tag = 'scoped memory for tpu_custom_call.1']
    #allocation10 [shape = 'u8[65536]{0}', space=vmem, size = 0x10000, scoped, tag = 'input window, operand 5, single buffered']
    #allocation11 [shape = 'u8[196608]{0}', space=vmem, size = 0x30000, scoped, tag = 'input window, operand 7, single buffered']
    #allocation12 [shape = 's32[1]{0}', space=sflag, size = 0x4, scoped, tag = 'scoped memory for tpu_custom_call.1']
    #allocation13 [shape = 'u8[196608]{0}', space=vmem, size = 0x30000, scoped, tag = 'input window, operand 8, single buffered']
    #allocation14 [shape = 'u8[196608]{0}', space=vmem, size = 0x30000, scoped, tag = 'input window, operand 9, single buffered']
    #allocation15 [shape = 's32[1]{0}', space=sflag, size = 0x4, scoped, tag = 'scoped memory for tpu_custom_call.1']
    #allocation16 [shape = 'u8[196608]{0}', space=vmem, size = 0x30000, scoped, tag = 'input window, operand 12, single buffered']
    #allocation17 [shape = 'u8[196608]{0}', space=vmem, size = 0x30000, scoped, tag = 'input window, operand 13, single buffered']
    #allocation18 [shape = 's32[1]{0}', space=sflag, size = 0x4, scoped, tag = 'scoped memory for tpu_custom_call.1']
    #allocation19 [shape = 'u8[65536]{0}', space=vmem, size = 0x10000, scoped, tag = 'input window, operand 16, single buffered']
    #allocation20 [shape = 'u8[65536]{0}', space=vmem, size = 0x10000, scoped, tag = 'input window, operand 17, single buffered']
    #allocation21 [shape = 's32[1]{0}', space=sflag, size = 0x4, scoped, tag = 'scoped memory for tpu_custom_call.1']
    #allocation22 [shape = 'u8[4096]{0}', space=vmem, size = 0x1000, scoped, tag = 'output window, operand 0, single buffered']
    #allocation23 [shape = 'u8[8192]{0}', space=vmem, size = 0x2000, scoped, tag = 'output window, operand 1, single buffered']
    #allocation24 [shape = 's32[1]{0}', space=sflag, size = 0x4, scoped, tag = 'scoped memory for tpu_custom_call.1']
    %26 = vsyncpa [#allocation3], 0
    %27 = vsyncpa [#allocation6], 0
    %28 = vsyncpa [#allocation9], 0
    %29 = vsyncpa [#allocation12], 0
    %30 = vsyncpa [#allocation15], 0
    %31 = vsyncpa [#allocation18], 0
    %32 = vsyncpa [#allocation21], 0
    %33 = vsyncpa [#allocation4], 0
    %34 = vsyncpa [#allocation24], 0
    // Predicated region
    $region2: #{tpu_custom_call.1} parent=1 // pred_check
      _
    $region3: #{tpu_custom_call.1} parent=1 // pred_check_branch
      %36 = sbr.rel (0) target = $region5
    $region4: #{tpu_custom_call.1} parent=1 // pred_region
      %s38 = ssub.s32 128, 128
      %39 = vsyncadd [#allocation3], %s38
      %s41 = sshll.u32 [#allocation2], 4
      %s42 = int_to_ptr.vmem [resolvable:$true] %s41
      %44 = dma.hbm_to_vmem [thread:$0]  %s0, 128, %s42, [#allocation3]
    $region5: #{tpu_custom_call.1} parent=1 // pred_fallthru
      _
    // Predicated region
    $region6: #{tpu_custom_call.1} parent=1 // pred_check
      _
    $region7: #{tpu_custom_call.1} parent=1 // pred_check_branch
      %46 = sbr.rel (0) target = $region9
    $region8: #{tpu_custom_call.1} parent=1 // pred_region
      %s48 = ssub.s32 256, 256
      %49 = vsyncadd [#allocation6], %s48
      %s50 = sshll.u32 [#allocation5], 4
      %s51 = int_to_ptr.vmem [resolvable:$true] %s50
      %56 = dma.hbm_to_vmem [thread:$0]  %s1, 256, %s51, [#allocation6], 128, 128, 8
    $region9: #{tpu_custom_call.1} parent=1 // pred_fallthru
      _
    // Predicated region
    $region10: #{tpu_custom_call.1} parent=1 // pred_check
      _
    $region11: #{tpu_custom_call.1} parent=1 // pred_check_branch
      %58 = sbr.rel (0) target = $region13
    $region12: #{tpu_custom_call.1} parent=1 // pred_region
      %s60 = ssub.s32 1024, 1024
      %61 = vsyncadd [#allocation6], %s60
      %s62 = sshll.u32 [#allocation7], 4
      %s63 = int_to_ptr.vmem [resolvable:$true] %s62
      %68 = dma.hbm_to_vmem [thread:$0]  %s2, 1024, %s63, [#allocation6], 128, 128, 8
    $region13: #{tpu_custom_call.1} parent=1 // pred_fallthru
      _
    // Predicated region
    $region14: #{tpu_custom_call.1} parent=1 // pred_check
      _
    $region15: #{tpu_custom_call.1} parent=1 // pred_check_branch
      %70 = sbr.rel (0) target = $region17
    $region16: #{tpu_custom_call.1} parent=1 // pred_region
      %s72 = ssub.s32 1024, 1024
      %73 = vsyncadd [#allocation9], %s72
      %s74 = sshll.u32 [#allocation8], 4
      %s75 = int_to_ptr.vmem [resolvable:$true] %s74
      %80 = dma.hbm_to_vmem [thread:$0]  %s3, 1024, %s75, [#allocation9], 128, 128, 8
    $region17: #{tpu_custom_call.1} parent=1 // pred_fallthru
      _
    // Predicated region
    $region18: #{tpu_custom_call.1} parent=1 // pred_check
      _
    $region19: #{tpu_custom_call.1} parent=1 // pred_check_branch
      %82 = sbr.rel (0) target = $region21
    $region20: #{tpu_custom_call.1} parent=1 // pred_region
      _
    $region21: #{tpu_custom_call.1} parent=1 // pred_fallthru
      _
    // Predicated region
    $region22: #{tpu_custom_call.1} parent=1 // pred_check
      _
    $region23: #{tpu_custom_call.1} parent=1 // pred_check_branch
      %84 = sbr.rel (0) target = $region25
    $region24: #{tpu_custom_call.1} parent=1 // pred_region
      %s86 = ssub.s32 2048, 2048
      %87 = vsyncadd [#allocation9], %s86
      %s88 = sshll.u32 [#allocation10], 4
      %s89 = int_to_ptr.vmem [resolvable:$true] %s88
      %94 = dma.hbm_to_vmem [thread:$0]  %s5, 2048, %s89, [#allocation9], 128, 128, 8
    $region25: #{tpu_custom_call.1} parent=1 // pred_fallthru
      _
    // Predicated region
    $region26: #{tpu_custom_call.1} parent=1 // pred_check
      _
    $region27: #{tpu_custom_call.1} parent=1 // pred_check_branch
      %96 = sbr.rel (0) target = $region29
    $region28: #{tpu_custom_call.1} parent=1 // pred_region
      _
    $region29: #{tpu_custom_call.1} parent=1 // pred_fallthru
      _
    // Predicated region
    $region30: #{tpu_custom_call.1} parent=1 // pred_check
      _
    $region31: #{tpu_custom_call.1} parent=1 // pred_check_branch
      %98 = sbr.rel (0) target = $region33
    $region32: #{tpu_custom_call.1} parent=1 // pred_region
      %s100 = ssub.s32 6144, 6144
      %101 = vsyncadd [#allocation12], %s100
      %s102 = sshll.u32 [#allocation11], 4
      %s103 = int_to_ptr.vmem [resolvable:$true] %s102
      %108 = dma.hbm_to_vmem [thread:$0]  %s7, 6144, %s103, [#allocation12], 384, 384, 24
    $region33: #{tpu_custom_call.1} parent=1 // pred_fallthru
      _
    // Predicated region
    $region34: #{tpu_custom_call.1} parent=1 // pred_check
      _
    $region35: #{tpu_custom_call.1} parent=1 // pred_check_branch
      %110 = sbr.rel (0) target = $region37
    $region36: #{tpu_custom_call.1} parent=1 // pred_region
      %s112 = ssub.s32 6144, 6144
      %113 = vsyncadd [#allocation12], %s112
      %s114 = sshll.u32 [#allocation13], 4
      %s115 = int_to_ptr.vmem [resolvable:$true] %s114
      %120 = dma.hbm_to_vmem [thread:$0]  %s8, 6144, %s115, [#allocation12], 384, 384, 24
    $region37: #{tpu_custom_call.1} parent=1 // pred_fallthru
      _
    // Predicated region
    $region38: #{tpu_custom_call.1} parent=1 // pred_check
      _
    $region39: #{tpu_custom_call.1} parent=1 // pred_check_branch
      %122 = sbr.rel (0) target = $region41
    $region40: #{tpu_custom_call.1} parent=1 // pred_region
      %s124 = ssub.s32 6144, 6144
      %125 = vsyncadd [#allocation15], %s124
      %s126 = sshll.u32 [#allocation14], 4
      %s127 = int_to_ptr.vmem [resolvable:$true] %s126
      %132 = dma.hbm_to_vmem [thread:$0]  %s9, 6144, %s127, [#allocation15], 384, 384, 24
    $region41: #{tpu_custom_call.1} parent=1 // pred_fallthru
      _
    // Predicated region
    $region42: #{tpu_custom_call.1} parent=1 // pred_check
      _
    $region43: #{tpu_custom_call.1} parent=1 // pred_check_branch
      %134 = sbr.rel (0) target = $region45
    $region44: #{tpu_custom_call.1} parent=1 // pred_region
      _
    $region45: #{tpu_custom_call.1} parent=1 // pred_fallthru
      _
    // Predicated region
    $region46: #{tpu_custom_call.1} parent=1 // pred_check
      _
    $region47: #{tpu_custom_call.1} parent=1 // pred_check_branch
      %136 = sbr.rel (0) target = $region49
    $region48: #{tpu_custom_call.1} parent=1 // pred_region
      _
    $region49: #{tpu_custom_call.1} parent=1 // pred_fallthru
      _
    // Predicated region
    $region50: #{tpu_custom_call.1} parent=1 // pred_check
      _
    $region51: #{tpu_custom_call.1} parent=1 // pred_check_branch
      %138 = sbr.rel (0) target = $region53
    $region52: #{tpu_custom_call.1} parent=1 // pred_region
      %s140 = ssub.s32 6144, 6144
      %141 = vsyncadd [#allocation15], %s140
      %s142 = sshll.u32 [#allocation16], 4
      %s143 = int_to_ptr.vmem [resolvable:$true] %s142
      %148 = dma.hbm_to_vmem [thread:$0]  %s12, 6144, %s143, [#allocation15], 384, 384, 24
    $region53: #{tpu_custom_call.1} parent=1 // pred_fallthru
      _
    // Predicated region
    $region54: #{tpu_custom_call.1} parent=1 // pred_check
      _
    $region55: #{tpu_custom_call.1} parent=1 // pred_check_branch
      %150 = sbr.rel (0) target = $region57
    $region56: #{tpu_custom_call.1} parent=1 // pred_region
      %s152 = ssub.s32 6144, 6144
      %153 = vsyncadd [#allocation18], %s152
      %s154 = sshll.u32 [#allocation17], 4
      %s155 = int_to_ptr.vmem [resolvable:$true] %s154
      %160 = dma.hbm_to_vmem [thread:$0]  %s13, 6144, %s155, [#allocation18], 384, 384, 24
    $region57: #{tpu_custom_call.1} parent=1 // pred_fallthru
      _
    // Predicated region
    $region58: #{tpu_custom_call.1} parent=1 // pred_check
      _
    $region59: #{tpu_custom_call.1} parent=1 // pred_check_branch
      %162 = sbr.rel (0) target = $region61
    $region60: #{tpu_custom_call.1} parent=1 // pred_region
      _
    $region61: #{tpu_custom_call.1} parent=1 // pred_fallthru
      _
    // Predicated region
    $region62: #{tpu_custom_call.1} parent=1 // pred_check
      _
    $region63: #{tpu_custom_call.1} parent=1 // pred_check_branch
      %164 = sbr.rel (0) target = $region65
    $region64: #{tpu_custom_call.1} parent=1 // pred_region
      _
    $region65: #{tpu_custom_call.1} parent=1 // pred_fallthru
      _
    // Predicated region
    $region66: #{tpu_custom_call.1} parent=1 // pred_check
      _
    $region67: #{tpu_custom_call.1} parent=1 // pred_check_branch
      %166 = sbr.rel (0) target = $region69
    $region68: #{tpu_custom_call.1} parent=1 // pred_region
      %s168 = ssub.s32 2048, 2048
      %169 = vsyncadd [#allocation18], %s168
      %s170 = sshll.u32 [#allocation19], 4
      %s171 = int_to_ptr.vmem [resolvable:$true] %s170
      %176 = dma.hbm_to_vmem [thread:$0]  %s16, 2048, %s171, [#allocation18], 128, 128, 8
    $region69: #{tpu_custom_call.1} parent=1 // pred_fallthru
      _
    // Predicated region
    $region70: #{tpu_custom_call.1} parent=1 // pred_check
      _
    $region71: #{tpu_custom_call.1} parent=1 // pred_check_branch
      %178 = sbr.rel (0) target = $region73
    $region72: #{tpu_custom_call.1} parent=1 // pred_region
      %s180 = ssub.s32 2048, 2048
      %181 = vsyncadd [#allocation21], %s180
      %s182 = sshll.u32 [#allocation20], 4
      %s183 = int_to_ptr.vmem [resolvable:$true] %s182
      %188 = dma.hbm_to_vmem [thread:$0]  %s17, 2048, %s183, [#allocation21], 128, 128, 8
    $region73: #{tpu_custom_call.1} parent=1 // pred_fallthru
      _
    // Predicated region
    $region74: #{tpu_custom_call.1} parent=1 // pred_check
      _
    $region75: #{tpu_custom_call.1} parent=1 // pred_check_branch
      %190 = sbr.rel (0) target = $region77
    $region76: #{tpu_custom_call.1} parent=1 // pred_region
      _
    $region77: #{tpu_custom_call.1} parent=1 // pred_fallthru
      _
    // Predicated region
    $region78: #{tpu_custom_call.1} parent=1 // pred_check
      _
    $region79: #{tpu_custom_call.1} parent=1 // pred_check_branch
      %192 = sbr.rel (0) target = $region81
    $region80: #{tpu_custom_call.1} parent=1 // pred_region
      %193 = dma.done [#allocation3], 128
    $region81: #{tpu_custom_call.1} parent=1 // pred_fallthru
      _
    // Predicated region
    $region82: #{tpu_custom_call.1} parent=1 // pred_check
      _
    $region83: #{tpu_custom_call.1} parent=1 // pred_check_branch
      %195 = sbr.rel (0) target = $region85
    $region84: #{tpu_custom_call.1} parent=1 // pred_region
      %196 = dma.done [#allocation6], 256
    $region85: #{tpu_custom_call.1} parent=1 // pred_fallthru
      _
    // Predicated region
    $region86: #{tpu_custom_call.1} parent=1 // pred_check
      _
    $region87: #{tpu_custom_call.1} parent=1 // pred_check_branch
      %198 = sbr.rel (0) target = $region89
    $region88: #{tpu_custom_call.1} parent=1 // pred_region
      %199 = dma.done [#allocation6], 1024
    $region89: #{tpu_custom_call.1} parent=1 // pred_fallthru
      _
    // Predicated region
    $region90: #{tpu_custom_call.1} parent=1 // pred_check
      _
    $region91: #{tpu_custom_call.1} parent=1 // pred_check_branch
      %201 = sbr.rel (0) target = $region93
    $region92: #{tpu_custom_call.1} parent=1 // pred_region
      %202 = dma.done [#allocation9], 1024
    $region93: #{tpu_custom_call.1} parent=1 // pred_fallthru
      _
    // Predicated region
    $region94: #{tpu_custom_call.1} parent=1 // pred_check
      _
    $region95: #{tpu_custom_call.1} parent=1 // pred_check_branch
      %204 = sbr.rel (0) target = $region97
    $region96: #{tpu_custom_call.1} parent=1 // pred_region
      %205 = dma.done [#allocation9], 2048
    $region97: #{tpu_custom_call.1} parent=1 // pred_fallthru
      _
    // Predicated region
    $region98: #{tpu_custom_call.1} parent=1 // pred_check
      _
    $region99: #{tpu_custom_call.1} parent=1 // pred_check_branch
      %207 = sbr.rel (0) target = $region101
    $region100: #{tpu_custom_call.1} parent=1 // pred_region
      %208 = dma.done [#allocation12], 6144
    $region101: #{tpu_custom_call.1} parent=1 // pred_fallthru
      _
    // Predicated region
    $region102: #{tpu_custom_call.1} parent=1 // pred_check
      _
    $region103: #{tpu_custom_call.1} parent=1 // pred_check_branch
      %210 = sbr.rel (0) target = $region105
    $region104: #{tpu_custom_call.1} parent=1 // pred_region
      %211 = dma.done [#allocation12], 6144
    $region105: #{tpu_custom_call.1} parent=1 // pred_fallthru
      _
    // Predicated region
    $region106: #{tpu_custom_call.1} parent=1 // pred_check
      _
    $region107: #{tpu_custom_call.1} parent=1 // pred_check_branch
      %213 = sbr.rel (0) target = $region109
    $region108: #{tpu_custom_call.1} parent=1 // pred_region
      %214 = dma.done [#allocation15], 6144
    $region109: #{tpu_custom_call.1} parent=1 // pred_fallthru
      _
    // Predicated region
    $region110: #{tpu_custom_call.1} parent=1 // pred_check
      _
    $region111: #{tpu_custom_call.1} parent=1 // pred_check_branch
      %216 = sbr.rel (0) target = $region113
    $region112: #{tpu_custom_call.1} parent=1 // pred_region
      %217 = dma.done [#allocation15], 6144
    $region113: #{tpu_custom_call.1} parent=1 // pred_fallthru
      _
    // Predicated region
    $region114: #{tpu_custom_call.1} parent=1 // pred_check
      _
    $region115: #{tpu_custom_call.1} parent=1 // pred_check_branch
      %219 = sbr.rel (0) target = $region117
    $region116: #{tpu_custom_call.1} parent=1 // pred_region
      %220 = dma.done [#allocation18], 6144
    $region117: #{tpu_custom_call.1} parent=1 // pred_fallthru
      _
    // Predicated region
    $region118: #{tpu_custom_call.1} parent=1 // pred_check
      _
    $region119: #{tpu_custom_call.1} parent=1 // pred_check_branch
      %222 = sbr.rel (0) target = $region121
    $region120: #{tpu_custom_call.1} parent=1 // pred_region
      %223 = dma.done [#allocation18], 2048
    $region121: #{tpu_custom_call.1} parent=1 // pred_fallthru
      _
    // Predicated region
    $region122: #{tpu_custom_call.1} parent=1 // pred_check
      _
    $region123: #{tpu_custom_call.1} parent=1 // pred_check_branch
      %225 = sbr.rel (0) target = $region125
    $region124: #{tpu_custom_call.1} parent=1 // pred_region
      %226 = dma.done [#allocation21], 2048
    $region125: #{tpu_custom_call.1} parent=1 // pred_fallthru
      _
    %p227 = scmp.eq.s32.totalorder 0, 0
    // Predicated region
    $region126: #{tpu_custom_call.1} parent=1 // pred_check
      %p228 = pneg %p227
    $region127: #{tpu_custom_call.1} parent=1 // pred_check_branch
      %230 = sbr.rel (%p228) target = $region129
    $region128: #{tpu_custom_call.1} parent=1 // pred_region
      %v231 = vld [vmem:[#allocation5] sm:$0xff]
      %v232 = vld [vmem:[#allocation5 + $0x8] sm:$0xff]
      %233 = vst [vmem:[#allocation23] sm:$0xff] %v231
      %234 = vst [vmem:[#allocation23 + $0x8] sm:$0xff] %v232
    $region129: #{tpu_custom_call.1} parent=1 // pred_fallthru
      _
    %v235 = vld [vmem:[#allocation23] sm:$0xff]
    %s236 = scalar_lea.vmem [#allocation23], 8
    %v237 = vld [vmem:[%s236] sm:$0xff]
    %v238 = vld [vmem:[#allocation2] sm:$0xff]
    %v239 = vld [vmem:[#allocation10] sm:$0xff]
    %v240 = vld [vmem:[#allocation10 + $0x8] sm:$0xff]
    %v241 = vld [vmem:[#allocation10 + $0x10] sm:$0xff]
    %v242 = vld [vmem:[#allocation10 + $0x18] sm:$0xff]
    %v243 = vld [vmem:[#allocation10 + $0x20] sm:$0xff]
    %v244 = vld [vmem:[#allocation10 + $0x28] sm:$0xff]
    %v245 = vld [vmem:[#allocation10 + $0x30] sm:$0xff]
    %v246 = vld [vmem:[#allocation10 + $0x38] sm:$0xff]
    %v247 = vld [vmem:[#allocation10 + $0x40] sm:$0xff]
    %v248 = vld [vmem:[#allocation10 + $0x48] sm:$0xff]
    %v249 = vld [vmem:[#allocation10 + $0x50] sm:$0xff]
    %v250 = vld [vmem:[#allocation10 + $0x58] sm:$0xff]
    %v251 = vld [vmem:[#allocation10 + $0x60] sm:$0xff]
    %v252 = vld [vmem:[#allocation10 + $0x68] sm:$0xff]
    %v253 = vld [vmem:[#allocation10 + $0x70] sm:$0xff]
    %v254 = vld [vmem:[#allocation10 + $0x78] sm:$0xff]
    %255 = vmatprep.subr.mxu0 0.0
    %256 = vmatpush1.msra.mxu0 %v239
    %257 = vmatprep.subr.mxu0 0.0
    %258 = vmatpush1.msra.mxu0 %v240
    %259 = vmatprep.subr.mxu0 0.0
    %260 = vmatpush1.msra.mxu0 %v241
    %261 = vmatprep.subr.mxu0 0.0
    %262 = vmatpush1.msra.mxu0 %v242
    %263 = vmatprep.subr.mxu0 0.0
    %264 = vmatpush1.msra.mxu0 %v243
    %265 = vmatprep.subr.mxu0 0.0
    %266 = vmatpush1.msra.mxu0 %v244
    %267 = vmatprep.subr.mxu0 0.0
    %268 = vmatpush1.msra.mxu0 %v245
    %269 = vmatprep.subr.mxu0 0.0
    %270 = vmatpush1.msra.mxu0 %v246
    %271 = vmatprep.subr.mxu0 0.0
    %272 = vmatpush1.msra.mxu0 %v247
    %273 = vmatprep.subr.mxu0 0.0
    %274 = vmatpush1.msra.mxu0 %v248
    %275 = vmatprep.subr.mxu0 0.0
    %276 = vmatpush1.msra.mxu0 %v249
    %277 = vmatprep.subr.mxu0 0.0
    %278 = vmatpush1.msra.mxu0 %v250
    %279 = vmatprep.subr.mxu0 0.0
    %280 = vmatpush1.msra.mxu0 %v251
    %281 = vmatprep.subr.mxu0 0.0
    %282 = vmatpush1.msra.mxu0 %v252
    %283 = vmatprep.subr.mxu0 0.0
    %284 = vmatpush1.msra.mxu0 %v253
    %285 = vmatprep.subr.mxu0 0.0
    %286 = vmatpush1.msra.mxu0 %v254
    %287 = vmatprep.subr.mxu0 0.0
    %288 = vmatpush1.msra.mxu0 0.0
    %289 = vmatprep.subr.mxu0 0.0
    %290 = vmatpush1.msra.mxu0 0.0
    %291 = vmatprep.subr.mxu0 0.0
    %292 = vmatpush1.msra.mxu0 0.0
    %293 = vmatprep.subr.mxu0 0.0
    %294 = vmatpush1.msra.mxu0 0.0
    %295 = vmatprep.subr.mxu0 0.0
    %296 = vmatpush1.msra.mxu0 0.0
    %297 = vmatprep.subr.mxu0 0.0
    %298 = vmatpush1.msra.mxu0 0.0
    %299 = vmatprep.subr.mxu0 0.0
    %300 = vmatpush1.msra.mxu0 0.0
    %301 = vmatprep.subr.mxu0 0.0
    %302 = vmatpush1.msra.mxu0 0.0
    %303 = vmatprep.subr.mxu0 0.0
    %304 = vmatpush1.msra.mxu0 0.0
    %305 = vmatprep.subr.mxu0 0.0
    %306 = vmatpush1.msra.mxu0 0.0
    %307 = vmatprep.subr.mxu0 0.0
    %308 = vmatpush1.msra.mxu0 0.0
    %309 = vmatprep.subr.mxu0 0.0
    %310 = vmatpush1.msra.mxu0 0.0
    %311 = vmatprep.subr.mxu0 0.0
    %312 = vmatpush1.msra.mxu0 0.0
    %313 = vmatprep.subr.mxu0 0.0
    %314 = vmatpush1.msra.mxu0 0.0
    %315 = vmatprep.subr.mxu0 0.0
    %316 = vmatpush1.msra.mxu0 0.0
    %317 = vmatprep.subr.mxu0 0.0
    %318 = vmatpush1.msra.mxu0 0.0
    %319 = vmatprep.mubr.f32.mxu0 0.0
    %320 = vmatmul.mubr.f32.gmra.mrb[0].mxu0 %v237
    %v321 = vpop.f32.mrb[0].mxu0
    %v322 = vadd.f32 0.0, %v321
    %v323 = vpop.f32.mrb[0].mxu0
    %324 = vdwg.mxu0
    %v326 = vcombine.high %v322, %v322
    %v328 = vunpack.c.l.s4 1966171168
    %v329 = vunpack.c.0.s8 %v328
    %v330 = vlaneseq
    %v331 = vshrl.u32 %v330, 7
    %v332 = vsub.s32 %v329, %v331
    %v333 = vrot.slane %v322, %v332
    %v335 = vunpack.c.l.s4 1966171168
    %v336 = vunpack.c.0.s8 %v335
    %v337 = vlaneseq
    %v338 = vshrl.u32 %v337, 7
    %v339 = vsub.s32 %v336, %v338
    %v340 = vrot.slane %v326, %v339
    %v341 = vcombine.high %v333, %v333
    %v342 = vcombine.high %v340, %v340
    %v344 = vunpack.c.l.s4 1966171168
    %v345 = vunpack.c.0.s8 %v344
    %v346 = vlaneseq
    %v347 = vshrl.u32 %v346, 7
    %v348 = vsub.s32 %v345, %v347
    %v349 = vrot.slane %v333, %v348
    %v351 = vunpack.c.l.s4 1966171168
    %v352 = vunpack.c.0.s8 %v351
    %v353 = vlaneseq
    %v354 = vshrl.u32 %v353, 7
    %v355 = vsub.s32 %v352, %v354
    %v356 = vrot.slane %v340, %v355
    %v358 = vunpack.c.l.s4 1966171168
    %v359 = vunpack.c.0.s8 %v358
    %v360 = vlaneseq
    %v361 = vshrl.u32 %v360, 7
    %v362 = vsub.s32 %v359, %v361
    %v363 = vrot.slane %v341, %v362
    %v365 = vunpack.c.l.s4 1966171168
    %v366 = vunpack.c.0.s8 %v365
    %v367 = vlaneseq
    %v368 = vshrl.u32 %v367, 7
    %v369 = vsub.s32 %v366, %v368
    %v370 = vrot.slane %v342, %v369
    %v371 = vcombine.high %v349, %v349
    %v372 = vcombine.high %v356, %v356
    %v373 = vcombine.high %v363, %v363
    %v374 = vcombine.high %v370, %v370
    %v375 = vld [vmem:[#allocation8] sm:$0xff]
    %v376 = vld [vmem:[#allocation8 + $0x8] sm:$0xff]
    %v377 = vld [vmem:[#allocation8 + $0x10] sm:$0xff]
    %v378 = vld [vmem:[#allocation8 + $0x18] sm:$0xff]
    %v379 = vld [vmem:[#allocation8 + $0x20] sm:$0xff]
    %v380 = vld [vmem:[#allocation8 + $0x28] sm:$0xff]
    %v381 = vld [vmem:[#allocation8 + $0x30] sm:$0xff]
    %v382 = vld [vmem:[#allocation8 + $0x38] sm:$0xff]
    %v383 = vlaneseq
    %v384 = vshrl.u32 %v383, 7
    %v385 = vsub.s32 0, %v384
    %v386 = vrot.slane %v349, %v385
    %v387 = vlaneseq
    %v388 = vshrl.u32 %v387, 7
    %v389 = vsub.s32 0, %v388
    %v390 = vrot.slane %v363, %v389
    %v391 = vlaneseq
    %v392 = vshrl.u32 %v391, 7
    %v393 = vsub.s32 0, %v392
    %v394 = vrot.slane %v371, %v393
    %v395 = vlaneseq
    %v396 = vshrl.u32 %v395, 7
    %v397 = vsub.s32 0, %v396
    %v398 = vrot.slane %v373, %v397
    %v399 = vlaneseq
    %v400 = vshrl.u32 %v399, 7
    %v401 = vsub.s32 0, %v400
    %v402 = vrot.slane %v356, %v401
    %v403 = vlaneseq
    %v404 = vshrl.u32 %v403, 7
    %v405 = vsub.s32 0, %v404
    %v406 = vrot.slane %v370, %v405
    %v407 = vlaneseq
    %v408 = vshrl.u32 %v407, 7
    %v409 = vsub.s32 0, %v408
    %v410 = vrot.slane %v372, %v409
    %v411 = vlaneseq
    %v412 = vshrl.u32 %v411, 7
    %v413 = vsub.s32 0, %v412
    %v414 = vrot.slane %v374, %v413
    %v423 = vadd.f32 %v386, %v375
    %v424 = vadd.f32 %v390, %v376
    %v425 = vadd.f32 %v394, %v377
    %v426 = vadd.f32 %v398, %v378
    %v427 = vadd.f32 %v402, %v379
    %v428 = vadd.f32 %v406, %v380
    %v429 = vadd.f32 %v410, %v381
    %v430 = vadd.f32 %v414, %v382
    %v431 = vtanh.pop %v423
    %v432 = vtanh.pop %v424
    %v433 = vtanh.pop %v425
    %v434 = vtanh.pop %v426
    %v435 = vtanh.pop %v427
    %v436 = vtanh.pop %v428
    %v437 = vtanh.pop %v429
    %v438 = vtanh.pop %v430
    %v439 = vld [vmem:[%s6] sm:$0x1]
    %v441 = vlaneseq
    %v442 = vshrl.u32 %v441, 7
    %v443 = vsub.s32 0, %v442
    %v444 = vrot.slane %v439, %v443
    %v446 = vmul.f32 %v431, %v444
    %v447 = vmul.f32 %v432, %v444
    %v448 = vmul.f32 %v433, %v444
    %v449 = vmul.f32 %v434, %v444
    %v450 = vmul.f32 %v435, %v444
    %v451 = vmul.f32 %v436, %v444
    %v452 = vmul.f32 %v437, %v444
    %v453 = vmul.f32 %v438, %v444
    %454 = vadd.xlane.f32.xlu0 %v446
    %v455 = vpop.xlane.xlu0 %454
    %456 = vadd.xlane.f32.xlu0 %v447
    %v457 = vpop.xlane.xlu0 %456
    %458 = vadd.xlane.f32.xlu0 %v448
    %v459 = vpop.xlane.xlu0 %458
    %460 = vadd.xlane.f32.xlu0 %v449
    %v461 = vpop.xlane.xlu0 %460
    %462 = vadd.xlane.f32.xlu0 %v450
    %v463 = vpop.xlane.xlu0 %462
    %464 = vadd.xlane.f32.xlu0 %v451
    %v465 = vpop.xlane.xlu0 %464
    %466 = vadd.xlane.f32.xlu0 %v452
    %v467 = vpop.xlane.xlu0 %466
    %468 = vadd.xlane.f32.xlu0 %v453
    %v469 = vpop.xlane.xlu0 %468
    %v470 = vld [vmem:[%s4] sm:$0xff]
    %vm471 = vcmp.gt.f32.partialorder %v470, 0.5
    %v480 = vlaneseq
    %v481 = vand.u32 %v480, 127
    %v482 = vlaneseq
    %v483 = vshrl.u32 %v482, 7
    %v484 = vsub.s32 %v481, %v483
    %v485 = vrot.slane %v455, %v484
    %v486 = vlaneseq
    %v487 = vshrl.u32 %v486, 7
    %v488 = vsub.s32 %v481, %v487
    %v489 = vrot.slane %v457, %v488
    %v490 = vlaneseq
    %v491 = vshrl.u32 %v490, 7
    %v492 = vsub.s32 %v481, %v491
    %v493 = vrot.slane %v459, %v492
    %v494 = vlaneseq
    %v495 = vshrl.u32 %v494, 7
    %v496 = vsub.s32 %v481, %v495
    %v497 = vrot.slane %v461, %v496
    %v498 = vlaneseq
    %v499 = vshrl.u32 %v498, 7
    %v500 = vsub.s32 %v481, %v499
    %v501 = vrot.slane %v463, %v500
    %v502 = vlaneseq
    %v503 = vshrl.u32 %v502, 7
    %v504 = vsub.s32 %v481, %v503
    %v505 = vrot.slane %v465, %v504
    %v506 = vlaneseq
    %v507 = vshrl.u32 %v506, 7
    %v508 = vsub.s32 %v481, %v507
    %v509 = vrot.slane %v467, %v508
    %v510 = vlaneseq
    %v511 = vshrl.u32 %v510, 7
    %v512 = vsub.s32 %v481, %v511
    %v513 = vrot.slane %v469, %v512
    %vm514 = vcmask 1041409
    %v515 = vsel %vm514, %v489, %v485
    %vm516 = vcmask 1042434
    %v517 = vsel %vm516, %v493, %v515
    %vm518 = vcmask 1043459
    %v519 = vsel %vm518, %v497, %v517
    %vm520 = vcmask 1044484
    %v521 = vsel %vm520, %v501, %v519
    %vm522 = vcmask 1045509
    %v523 = vsel %vm522, %v505, %v521
    %vm524 = vcmask 1046534
    %v525 = vsel %vm524, %v509, %v523
    %vm526 = vcmask 1047559
    %v527 = vsel %vm526, %v513, %v525
    %v529 = vsel %vm471, -1e+12, %v527
    %vm530 = vcmask 64512
    %v531 = vsel %vm530, %v529, -inf
    %532 = vmax.xlane.f32.xlu0 %v531
    %v533 = vpop.xlane.xlu0 %532
    %v534 = vsub.f32 %v529, %v533
    %v535 = vmul.f32 %v534, 1.442695
    %v536 = vpow.pop %v535
    %v537 = vsel %vm530, %v536, 0.0
    %538 = vadd.xlane.f32.xlu0 %v537
    %v539 = vpop.xlane.xlu0 %538
    %v540 = vrcp.pop %v539
    %v541 = vmul.f32 %v539, %v540
    %v542 = vsub.f32 2.0, %v541
    %v543 = vmul.f32 %v540, %v542
    %v544 = vmul.f32 %v536, %v543
    %v545 = vlaneseq
    %v546 = vshrl.u32 %v545, 7
    %v547 = vsub.s32 0, %v546
    %v548 = vrot.slane %v544, %v547
    %550 = vbcast.lane.b32.xlu0 %v548, 256
    %v551 = vpop.permute.xlu0 %550
    %v552 = vlaneseq
    %v553 = vshrl.u32 %v552, 7
    %v554 = vsub.s32 1, %v553
    %v555 = vrot.slane %v544, %v554
    %557 = vbcast.lane.b32.xlu0 %v555, 256
    %v558 = vpop.permute.xlu0 %557
    %v559 = vlaneseq
    %v560 = vshrl.u32 %v559, 7
    %v561 = vsub.s32 2, %v560
    %v562 = vrot.slane %v544, %v561
    %564 = vbcast.lane.b32.xlu0 %v562, 256
    %v565 = vpop.permute.xlu0 %564
    %v566 = vlaneseq
    %v567 = vshrl.u32 %v566, 7
    %v568 = vsub.s32 3, %v567
    %v569 = vrot.slane %v544, %v568
    %571 = vbcast.lane.b32.xlu0 %v569, 256
    %v572 = vpop.permute.xlu0 %571
    %v573 = vlaneseq
    %v574 = vshrl.u32 %v573, 7
    %v575 = vsub.s32 4, %v574
    %v576 = vrot.slane %v544, %v575
    %578 = vbcast.lane.b32.xlu0 %v576, 256
    %v579 = vpop.permute.xlu0 %578
    %v580 = vlaneseq
    %v581 = vshrl.u32 %v580, 7
    %v582 = vsub.s32 5, %v581
    %v583 = vrot.slane %v544, %v582
    %585 = vbcast.lane.b32.xlu0 %v583, 256
    %v586 = vpop.permute.xlu0 %585
    %v587 = vlaneseq
    %v588 = vshrl.u32 %v587, 7
    %v589 = vsub.s32 6, %v588
    %v590 = vrot.slane %v544, %v589
    %592 = vbcast.lane.b32.xlu0 %v590, 256
    %v593 = vpop.permute.xlu0 %592
    %v594 = vlaneseq
    %v595 = vshrl.u32 %v594, 7
    %v596 = vsub.s32 7, %v595
    %v597 = vrot.slane %v544, %v596
    %599 = vbcast.lane.b32.xlu0 %v597, 256
    %v600 = vpop.permute.xlu0 %599
    %v601 = vld [vmem:[#allocation7] sm:$0xff]
    %v602 = vld [vmem:[#allocation7 + $0x8] sm:$0xff]
    %v603 = vld [vmem:[#allocation7 + $0x10] sm:$0xff]
    %v604 = vld [vmem:[#allocation7 + $0x18] sm:$0xff]
    %v605 = vld [vmem:[#allocation7 + $0x20] sm:$0xff]
    %v606 = vld [vmem:[#allocation7 + $0x28] sm:$0xff]
    %v607 = vld [vmem:[#allocation7 + $0x30] sm:$0xff]
    %v608 = vld [vmem:[#allocation7 + $0x38] sm:$0xff]
    %v609 = vmul.f32 %v551, %v601
    %v610 = vmul.f32 %v558, %v602
    %v611 = vmul.f32 %v565, %v603
    %v612 = vmul.f32 %v572, %v604
    %v613 = vmul.f32 %v579, %v605
    %v614 = vmul.f32 %v586, %v606
    %v615 = vmul.f32 %v593, %v607
    %v616 = vmul.f32 %v600, %v608
    %v617 = vrot.slane %v609, 4
    %v618 = vadd.f32 %v609, %v617
    %v619 = vrot.slane %v618, 2
    %v620 = vadd.f32 %v618, %v619
    %v621 = vrot.slane %v620, 1
    %v622 = vadd.f32 %v620, %v621
    %v623 = vrot.slane %v610, 4
    %v624 = vadd.f32 %v610, %v623
    %v625 = vrot.slane %v624, 2
    %v626 = vadd.f32 %v624, %v625
    %v627 = vrot.slane %v626, 1
    %v628 = vadd.f32 %v626, %v627
    %v629 = vrot.slane %v611, 4
    %v630 = vadd.f32 %v611, %v629
    %v631 = vrot.slane %v630, 2
    %v632 = vadd.f32 %v630, %v631
    %v633 = vrot.slane %v632, 1
    %v634 = vadd.f32 %v632, %v633
    %v635 = vrot.slane %v612, 4
    %v636 = vadd.f32 %v612, %v635
    %v637 = vrot.slane %v636, 2
    %v638 = vadd.f32 %v636, %v637
    %v639 = vrot.slane %v638, 1
    %v640 = vadd.f32 %v638, %v639
    %v641 = vrot.slane %v613, 4
    %v642 = vadd.f32 %v613, %v641
    %v643 = vrot.slane %v642, 2
    %v644 = vadd.f32 %v642, %v643
    %v645 = vrot.slane %v644, 1
    %v646 = vadd.f32 %v644, %v645
    %v647 = vrot.slane %v614, 4
    %v648 = vadd.f32 %v614, %v647
    %v649 = vrot.slane %v648, 2
    %v650 = vadd.f32 %v648, %v649
    %v651 = vrot.slane %v650, 1
    %v652 = vadd.f32 %v650, %v651
    %v653 = vrot.slane %v615, 4
    %v654 = vadd.f32 %v615, %v653
    %v655 = vrot.slane %v654, 2
    %v656 = vadd.f32 %v654, %v655
    %v657 = vrot.slane %v656, 1
    %v658 = vadd.f32 %v656, %v657
    %v659 = vrot.slane %v616, 4
    %v660 = vadd.f32 %v616, %v659
    %v661 = vrot.slane %v660, 2
    %v662 = vadd.f32 %v660, %v661
    %v663 = vrot.slane %v662, 1
    %v664 = vadd.f32 %v662, %v663
    %v665 = vld [vmem:[#allocation11] sm:$0xff]
    %v666 = vld [vmem:[#allocation11 + $0x8] sm:$0xff]
    %v667 = vld [vmem:[#allocation11 + $0x10] sm:$0xff]
    %v668 = vld [vmem:[#allocation11 + $0x18] sm:$0xff]
    %v669 = vld [vmem:[#allocation11 + $0x20] sm:$0xff]
    %v670 = vld [vmem:[#allocation11 + $0x28] sm:$0xff]
    %v671 = vld [vmem:[#allocation11 + $0x30] sm:$0xff]
    %v672 = vld [vmem:[#allocation11 + $0x38] sm:$0xff]
    %v673 = vld [vmem:[#allocation11 + $0x40] sm:$0xff]
    %v674 = vld [vmem:[#allocation11 + $0x48] sm:$0xff]
    %v675 = vld [vmem:[#allocation11 + $0x50] sm:$0xff]
    %v676 = vld [vmem:[#allocation11 + $0x58] sm:$0xff]
    %v677 = vld [vmem:[#allocation11 + $0x60] sm:$0xff]
    %v678 = vld [vmem:[#allocation11 + $0x68] sm:$0xff]
    %v679 = vld [vmem:[#allocation11 + $0x70] sm:$0xff]
    %v680 = vld [vmem:[#allocation11 + $0x78] sm:$0xff]
    %v681 = vld [vmem:[#allocation11 + $0x80] sm:$0xff]
    %v682 = vld [vmem:[#allocation11 + $0x88] sm:$0xff]
    %v683 = vld [vmem:[#allocation11 + $0x90] sm:$0xff]
    %v684 = vld [vmem:[#allocation11 + $0x98] sm:$0xff]
    %v685 = vld [vmem:[#allocation11 + $0xa0] sm:$0xff]
    %v686 = vld [vmem:[#allocation11 + $0xa8] sm:$0xff]
    %v687 = vld [vmem:[#allocation11 + $0xb0] sm:$0xff]
    %v688 = vld [vmem:[#allocation11 + $0xb8] sm:$0xff]
    %v689 = vld [vmem:[#allocation11 + $0xc0] sm:$0xff]
    %v690 = vld [vmem:[#allocation11 + $0xc8] sm:$0xff]
    %v691 = vld [vmem:[#allocation11 + $0xd0] sm:$0xff]
    %v692 = vld [vmem:[#allocation11 + $0xd8] sm:$0xff]
    %v693 = vld [vmem:[#allocation11 + $0xe0] sm:$0xff]
    %v694 = vld [vmem:[#allocation11 + $0xe8] sm:$0xff]
    %v695 = vld [vmem:[#allocation11 + $0xf0] sm:$0xff]
    %v696 = vld [vmem:[#allocation11 + $0xf8] sm:$0xff]
    %v697 = vld [vmem:[#allocation11 + $0x100] sm:$0xff]
    %v698 = vld [vmem:[#allocation11 + $0x108] sm:$0xff]
    %v699 = vld [vmem:[#allocation11 + $0x110] sm:$0xff]
    %v700 = vld [vmem:[#allocation11 + $0x118] sm:$0xff]
    %v701 = vld [vmem:[#allocation11 + $0x120] sm:$0xff]
    %v702 = vld [vmem:[#allocation11 + $0x128] sm:$0xff]
    %v703 = vld [vmem:[#allocation11 + $0x130] sm:$0xff]
    %v704 = vld [vmem:[#allocation11 + $0x138] sm:$0xff]
    %v705 = vld [vmem:[#allocation11 + $0x140] sm:$0xff]
    %v706 = vld [vmem:[#allocation11 + $0x148] sm:$0xff]
    %v707 = vld [vmem:[#allocation11 + $0x150] sm:$0xff]
    %v708 = vld [vmem:[#allocation11 + $0x158] sm:$0xff]
    %v709 = vld [vmem:[#allocation11 + $0x160] sm:$0xff]
    %v710 = vld [vmem:[#allocation11 + $0x168] sm:$0xff]
    %v711 = vld [vmem:[#allocation11 + $0x170] sm:$0xff]
    %v712 = vld [vmem:[#allocation11 + $0x178] sm:$0xff]
    %v713 = vld [vmem:[#allocation13] sm:$0xff]
    %v714 = vld [vmem:[#allocation13 + $0x8] sm:$0xff]
    %v715 = vld [vmem:[#allocation13 + $0x10] sm:$0xff]
    %v716 = vld [vmem:[#allocation13 + $0x18] sm:$0xff]
    %v717 = vld [vmem:[#allocation13 + $0x20] sm:$0xff]
    %v718 = vld [vmem:[#allocation13 + $0x28] sm:$0xff]
    %v719 = vld [vmem:[#allocation13 + $0x30] sm:$0xff]
    %v720 = vld [vmem:[#allocation13 + $0x38] sm:$0xff]
    %v721 = vld [vmem:[#allocation13 + $0x40] sm:$0xff]
    %v722 = vld [vmem:[#allocation13 + $0x48] sm:$0xff]
    %v723 = vld [vmem:[#allocation13 + $0x50] sm:$0xff]
    %v724 = vld [vmem:[#allocation13 + $0x58] sm:$0xff]
    %v725 = vld [vmem:[#allocation13 + $0x60] sm:$0xff]
    %v726 = vld [vmem:[#allocation13 + $0x68] sm:$0xff]
    %v727 = vld [vmem:[#allocation13 + $0x70] sm:$0xff]
    %v728 = vld [vmem:[#allocation13 + $0x78] sm:$0xff]
    %v729 = vld [vmem:[#allocation13 + $0x80] sm:$0xff]
    %v730 = vld [vmem:[#allocation13 + $0x88] sm:$0xff]
    %v731 = vld [vmem:[#allocation13 + $0x90] sm:$0xff]
    %v732 = vld [vmem:[#allocation13 + $0x98] sm:$0xff]
    %v733 = vld [vmem:[#allocation13 + $0xa0] sm:$0xff]
    %v734 = vld [vmem:[#allocation13 + $0xa8] sm:$0xff]
    %v735 = vld [vmem:[#allocation13 + $0xb0] sm:$0xff]
    %v736 = vld [vmem:[#allocation13 + $0xb8] sm:$0xff]
    %v737 = vld [vmem:[#allocation13 + $0xc0] sm:$0xff]
    %v738 = vld [vmem:[#allocation13 + $0xc8] sm:$0xff]
    %v739 = vld [vmem:[#allocation13 + $0xd0] sm:$0xff]
    %v740 = vld [vmem:[#allocation13 + $0xd8] sm:$0xff]
    %v741 = vld [vmem:[#allocation13 + $0xe0] sm:$0xff]
    %v742 = vld [vmem:[#allocation13 + $0xe8] sm:$0xff]
    %v743 = vld [vmem:[#allocation13 + $0xf0] sm:$0xff]
    %v744 = vld [vmem:[#allocation13 + $0xf8] sm:$0xff]
    %v745 = vld [vmem:[#allocation13 + $0x100] sm:$0xff]
    %v746 = vld [vmem:[#allocation13 + $0x108] sm:$0xff]
    %v747 = vld [vmem:[#allocation13 + $0x110] sm:$0xff]
    %v748 = vld [vmem:[#allocation13 + $0x118] sm:$0xff]
    %v749 = vld [vmem:[#allocation13 + $0x120] sm:$0xff]
    %v750 = vld [vmem:[#allocation13 + $0x128] sm:$0xff]
    %v751 = vld [vmem:[#allocation13 + $0x130] sm:$0xff]
    %v752 = vld [vmem:[#allocation13 + $0x138] sm:$0xff]
    %v753 = vld [vmem:[#allocation13 + $0x140] sm:$0xff]
    %v754 = vld [vmem:[#allocation13 + $0x148] sm:$0xff]
    %v755 = vld [vmem:[#allocation13 + $0x150] sm:$0xff]
    %v756 = vld [vmem:[#allocation13 + $0x158] sm:$0xff]
    %v757 = vld [vmem:[#allocation13 + $0x160] sm:$0xff]
    %v758 = vld [vmem:[#allocation13 + $0x168] sm:$0xff]
    %v759 = vld [vmem:[#allocation13 + $0x170] sm:$0xff]
    %v760 = vld [vmem:[#allocation13 + $0x178] sm:$0xff]
    %v769 = vsel %vm514, %v628, %v622
    %v770 = vsel %vm516, %v634, %v769
    %v771 = vsel %vm518, %v640, %v770
    %v772 = vsel %vm520, %v646, %v771
    %v773 = vsel %vm522, %v652, %v772
    %v774 = vsel %vm524, %v658, %v773
    %v775 = vsel %vm526, %v664, %v774
    %777 = vmatprep.subr.mxu0 %v714
    %778 = vmatpush1.msra.mxu0 %v713
    %779 = vmatprep.subr.mxu0 %v717
    %780 = vmatpush1.msra.mxu0 %v716
    %781 = vmatprep.subr.mxu0 %v720
    %782 = vmatpush1.msra.mxu0 %v719
    %783 = vmatprep.subr.mxu0 %v723
    %784 = vmatpush1.msra.mxu0 %v722
    %785 = vmatprep.subr.mxu0 %v726
    %786 = vmatpush1.msra.mxu0 %v725
    %787 = vmatprep.subr.mxu0 %v729
    %788 = vmatpush1.msra.mxu0 %v728
    %789 = vmatprep.subr.mxu0 %v732
    %790 = vmatpush1.msra.mxu0 %v731
    %791 = vmatprep.subr.mxu0 %v735
    %792 = vmatpush1.msra.mxu0 %v734
    %793 = vmatprep.subr.mxu0 %v738
    %794 = vmatpush1.msra.mxu0 %v737
    %795 = vmatprep.subr.mxu0 %v741
    %796 = vmatpush1.msra.mxu0 %v740
    %797 = vmatprep.subr.mxu0 %v744
    %798 = vmatpush1.msra.mxu0 %v743
    %799 = vmatprep.subr.mxu0 %v747
    %800 = vmatpush1.msra.mxu0 %v746
    %801 = vmatprep.subr.mxu0 %v750
    %802 = vmatpush1.msra.mxu0 %v749
    %803 = vmatprep.subr.mxu0 %v753
    %804 = vmatpush1.msra.mxu0 %v752
    %805 = vmatprep.subr.mxu0 %v756
    %806 = vmatpush1.msra.mxu0 %v755
    %807 = vmatprep.subr.mxu0 %v759
    %808 = vmatpush1.msra.mxu0 %v758
    %809 = vmatprep.subr.mxu0 0.0
    %810 = vmatpush1.msra.mxu0 0.0
    %811 = vmatprep.subr.mxu0 0.0
    %812 = vmatpush1.msra.mxu0 0.0
    %813 = vmatprep.subr.mxu0 0.0
    %814 = vmatpush1.msra.mxu0 0.0
    %815 = vmatprep.subr.mxu0 0.0
    %816 = vmatpush1.msra.mxu0 0.0
    %817 = vmatprep.subr.mxu0 0.0
    %818 = vmatpush1.msra.mxu0 0.0
    %819 = vmatprep.subr.mxu0 0.0
    %820 = vmatpush1.msra.mxu0 0.0
    %821 = vmatprep.subr.mxu0 0.0
    %822 = vmatpush1.msra.mxu0 0.0
    %823 = vmatprep.subr.mxu0 0.0
    %824 = vmatpush1.msra.mxu0 0.0
    %825 = vmatprep.subr.mxu0 0.0
    %826 = vmatpush1.msra.mxu0 0.0
    %827 = vmatprep.subr.mxu0 0.0
    %828 = vmatpush1.msra.mxu0 0.0
    %829 = vmatprep.subr.mxu0 0.0
    %830 = vmatpush1.msra.mxu0 0.0
    %831 = vmatprep.subr.mxu0 0.0
    %832 = vmatpush1.msra.mxu0 0.0
    %833 = vmatprep.subr.mxu0 0.0
    %834 = vmatpush1.msra.mxu0 0.0
    %835 = vmatprep.subr.mxu0 0.0
    %836 = vmatpush1.msra.mxu0 0.0
    %837 = vmatprep.subr.mxu0 0.0
    %838 = vmatpush1.msra.mxu0 0.0
    %839 = vmatprep.subr.mxu0 0.0
    %840 = vmatpush1.msra.mxu0 0.0
    %841 = vmatprep.mubr.f32.mxu0 0.0
    %842 = vmatmul.mubr.f32.gmra.mrb[0].mxu0 %v775
    %v843 = vpop.f32.mrb[0].mxu0
    %v844 = vadd.f32 0.0, %v843
    %v845 = vpop.f32.mrb[0].mxu0
    %v846 = vadd.f32 0.0, %v845
    %847 = vdwg.mxu0
    %848 = vmatprep.subr.mxu0 0.0
    %849 = vmatpush1.msra.mxu0 %v715
    %850 = vmatprep.subr.mxu0 0.0
    %851 = vmatpush1.msra.mxu0 %v718
    %852 = vmatprep.subr.mxu0 0.0
    %853 = vmatpush1.msra.mxu0 %v721
    %854 = vmatprep.subr.mxu0 0.0
    %855 = vmatpush1.msra.mxu0 %v724
    %856 = vmatprep.subr.mxu0 0.0
    %857 = vmatpush1.msra.mxu0 %v727
    %858 = vmatprep.subr.mxu0 0.0
    %859 = vmatpush1.msra.mxu0 %v730
    %860 = vmatprep.subr.mxu0 0.0
    %861 = vmatpush1.msra.mxu0 %v733
    %862 = vmatprep.subr.mxu0 0.0
    %863 = vmatpush1.msra.mxu0 %v736
    %864 = vmatprep.subr.mxu0 0.0
    %865 = vmatpush1.msra.mxu0 %v739
    %866 = vmatprep.subr.mxu0 0.0
    %867 = vmatpush1.msra.mxu0 %v742
    %868 = vmatprep.subr.mxu0 0.0
    %869 = vmatpush1.msra.mxu0 %v745
    %870 = vmatprep.subr.mxu0 0.0
    %871 = vmatpush1.msra.mxu0 %v748
    %872 = vmatprep.subr.mxu0 0.0
    %873 = vmatpush1.msra.mxu0 %v751
    %874 = vmatprep.subr.mxu0 0.0
    %875 = vmatpush1.msra.mxu0 %v754
    %876 = vmatprep.subr.mxu0 0.0
    %877 = vmatpush1.msra.mxu0 %v757
    %878 = vmatprep.subr.mxu0 0.0
    %879 = vmatpush1.msra.mxu0 %v760
    %880 = vmatprep.subr.mxu0 0.0
    %881 = vmatpush1.msra.mxu0 0.0
    %882 = vmatprep.subr.mxu0 0.0
    %883 = vmatpush1.msra.mxu0 0.0
    %884 = vmatprep.subr.mxu0 0.0
    %885 = vmatpush1.msra.mxu0 0.0
    %886 = vmatprep.subr.mxu0 0.0
    %887 = vmatpush1.msra.mxu0 0.0
    %888 = vmatprep.subr.mxu0 0.0
    %889 = vmatpush1.msra.mxu0 0.0
    %890 = vmatprep.subr.mxu0 0.0
    %891 = vmatpush1.msra.mxu0 0.0
    %892 = vmatprep.subr.mxu0 0.0
    %893 = vmatpush1.msra.mxu0 0.0
    %894 = vmatprep.subr.mxu0 0.0
    %895 = vmatpush1.msra.mxu0 0.0
    %896 = vmatprep.subr.mxu0 0.0
    %897 = vmatpush1.msra.mxu0 0.0
    %898 = vmatprep.subr.mxu0 0.0
    %899 = vmatpush1.msra.mxu0 0.0
    %900 = vmatprep.subr.mxu0 0.0
    %901 = vmatpush1.msra.mxu0 0.0
    %902 = vmatprep.subr.mxu0 0.0
    %903 = vmatpush1.msra.mxu0 0.0
    %904 = vmatprep.subr.mxu0 0.0
    %905 = vmatpush1.msra.mxu0 0.0
    %906 = vmatprep.subr.mxu0 0.0
    %907 = vmatpush1.msra.mxu0 0.0
    %908 = vmatprep.subr.mxu0 0.0
    %909 = vmatpush1.msra.mxu0 0.0
    %910 = vmatprep.subr.mxu0 0.0
    %911 = vmatpush1.msra.mxu0 0.0
    %912 = vmatprep.mubr.f32.mxu0 0.0
    %913 = vmatmul.mubr.f32.gmra.mrb[0].mxu0 %v775
    %v914 = vpop.f32.mrb[0].mxu0
    %v915 = vadd.f32 0.0, %v914
    %v916 = vpop.f32.mrb[0].mxu0
    %917 = vdwg.mxu0
    %918 = vmatprep.subr.mxu0 %v666
    %919 = vmatpush1.msra.mxu0 %v665
    %920 = vmatprep.subr.mxu0 %v669
    %921 = vmatpush1.msra.mxu0 %v668
    %922 = vmatprep.subr.mxu0 %v672
    %923 = vmatpush1.msra.mxu0 %v671
    %924 = vmatprep.subr.mxu0 %v675
    %925 = vmatpush1.msra.mxu0 %v674
    %926 = vmatprep.subr.mxu0 %v678
    %927 = vmatpush1.msra.mxu0 %v677
    %928 = vmatprep.subr.mxu0 %v681
    %929 = vmatpush1.msra.mxu0 %v680
    %930 = vmatprep.subr.mxu0 %v684
    %931 = vmatpush1.msra.mxu0 %v683
    %932 = vmatprep.subr.mxu0 %v687
    %933 = vmatpush1.msra.mxu0 %v686
    %934 = vmatprep.subr.mxu0 %v690
    %935 = vmatpush1.msra.mxu0 %v689
    %936 = vmatprep.subr.mxu0 %v693
    %937 = vmatpush1.msra.mxu0 %v692
    %938 = vmatprep.subr.mxu0 %v696
    %939 = vmatpush1.msra.mxu0 %v695
    %940 = vmatprep.subr.mxu0 %v699
    %941 = vmatpush1.msra.mxu0 %v698
    %942 = vmatprep.subr.mxu0 %v702
    %943 = vmatpush1.msra.mxu0 %v701
    %944 = vmatprep.subr.mxu0 %v705
    %945 = vmatpush1.msra.mxu0 %v704
    %946 = vmatprep.subr.mxu0 %v708
    %947 = vmatpush1.msra.mxu0 %v707
    %948 = vmatprep.subr.mxu0 %v711
    %949 = vmatpush1.msra.mxu0 %v710
    %950 = vmatprep.subr.mxu0 0.0
    %951 = vmatpush1.msra.mxu0 0.0
    %952 = vmatprep.subr.mxu0 0.0
    %953 = vmatpush1.msra.mxu0 0.0
    %954 = vmatprep.subr.mxu0 0.0
    %955 = vmatpush1.msra.mxu0 0.0
    %956 = vmatprep.subr.mxu0 0.0
    %957 = vmatpush1.msra.mxu0 0.0
    %958 = vmatprep.subr.mxu0 0.0
    %959 = vmatpush1.msra.mxu0 0.0
    %960 = vmatprep.subr.mxu0 0.0
    %961 = vmatpush1.msra.mxu0 0.0
    %962 = vmatprep.subr.mxu0 0.0
    %963 = vmatpush1.msra.mxu0 0.0
    %964 = vmatprep.subr.mxu0 0.0
    %965 = vmatpush1.msra.mxu0 0.0
    %966 = vmatprep.subr.mxu0 0.0
    %967 = vmatpush1.msra.mxu0 0.0
    %968 = vmatprep.subr.mxu0 0.0
    %969 = vmatpush1.msra.mxu0 0.0
    %970 = vmatprep.subr.mxu0 0.0
    %971 = vmatpush1.msra.mxu0 0.0
    %972 = vmatprep.subr.mxu0 0.0
    %973 = vmatpush1.msra.mxu0 0.0
    %974 = vmatprep.subr.mxu0 0.0
    %975 = vmatpush1.msra.mxu0 0.0
    %976 = vmatprep.subr.mxu0 0.0
    %977 = vmatpush1.msra.mxu0 0.0
    %978 = vmatprep.subr.mxu0 0.0
    %979 = vmatpush1.msra.mxu0 0.0
    %980 = vmatprep.subr.mxu0 0.0
    %981 = vmatpush1.msra.mxu0 0.0
    %982 = vmatprep.mubr.f32.mxu0 0.0
    %983 = vmatmul.mubr.f32.gmra.mrb[0].mxu0 %v238
    %v984 = vpop.f32.mrb[0].mxu0
    %v985 = vadd.f32 %v844, %v984
    %v986 = vpop.f32.mrb[0].mxu0
    %v987 = vadd.f32 %v846, %v986
    %988 = vdwg.mxu0
    %989 = vmatprep.subr.mxu0 0.0
    %990 = vmatpush1.msra.mxu0 %v667
    %991 = vmatprep.subr.mxu0 0.0
    %992 = vmatpush1.msra.mxu0 %v670
    %993 = vmatprep.subr.mxu0 0.0
    %994 = vmatpush1.msra.mxu0 %v673
    %995 = vmatprep.subr.mxu0 0.0
    %996 = vmatpush1.msra.mxu0 %v676
    %997 = vmatprep.subr.mxu0 0.0
    %998 = vmatpush1.msra.mxu0 %v679
    %999 = vmatprep.subr.mxu0 0.0
    %1000 = vmatpush1.msra.mxu0 %v682
    %1001 = vmatprep.subr.mxu0 0.0
    %1002 = vmatpush1.msra.mxu0 %v685
    %1003 = vmatprep.subr.mxu0 0.0
    %1004 = vmatpush1.msra.mxu0 %v688
    %1005 = vmatprep.subr.mxu0 0.0
    %1006 = vmatpush1.msra.mxu0 %v691
    %1007 = vmatprep.subr.mxu0 0.0
    %1008 = vmatpush1.msra.mxu0 %v694
    %1009 = vmatprep.subr.mxu0 0.0
    %1010 = vmatpush1.msra.mxu0 %v697
    %1011 = vmatprep.subr.mxu0 0.0
    %1012 = vmatpush1.msra.mxu0 %v700
    %1013 = vmatprep.subr.mxu0 0.0
    %1014 = vmatpush1.msra.mxu0 %v703
    %1015 = vmatprep.subr.mxu0 0.0
    %1016 = vmatpush1.msra.mxu0 %v706
    %1017 = vmatprep.subr.mxu0 0.0
    %1018 = vmatpush1.msra.mxu0 %v709
    %1019 = vmatprep.subr.mxu0 0.0
    %1020 = vmatpush1.msra.mxu0 %v712
    %1021 = vmatprep.subr.mxu0 0.0
    %1022 = vmatpush1.msra.mxu0 0.0
    %1023 = vmatprep.subr.mxu0 0.0
    %1024 = vmatpush1.msra.mxu0 0.0
    %1025 = vmatprep.subr.mxu0 0.0
    %1026 = vmatpush1.msra.mxu0 0.0
    %1027 = vmatprep.subr.mxu0 0.0
    %1028 = vmatpush1.msra.mxu0 0.0
    %1029 = vmatprep.subr.mxu0 0.0
    %1030 = vmatpush1.msra.mxu0 0.0
    %1031 = vmatprep.subr.mxu0 0.0
    %1032 = vmatpush1.msra.mxu0 0.0
    %1033 = vmatprep.subr.mxu0 0.0
    %1034 = vmatpush1.msra.mxu0 0.0
    %1035 = vmatprep.subr.mxu0 0.0
    %1036 = vmatpush1.msra.mxu0 0.0
    %1037 = vmatprep.subr.mxu0 0.0
    %1038 = vmatpush1.msra.mxu0 0.0
    %1039 = vmatprep.subr.mxu0 0.0
    %1040 = vmatpush1.msra.mxu0 0.0
    %1041 = vmatprep.subr.mxu0 0.0
    %1042 = vmatpush1.msra.mxu0 0.0
    %1043 = vmatprep.subr.mxu0 0.0
    %1044 = vmatpush1.msra.mxu0 0.0
    %1045 = vmatprep.subr.mxu0 0.0
    %1046 = vmatpush1.msra.mxu0 0.0
    %1047 = vmatprep.subr.mxu0 0.0
    %1048 = vmatpush1.msra.mxu0 0.0
    %1049 = vmatprep.subr.mxu0 0.0
    %1050 = vmatpush1.msra.mxu0 0.0
    %1051 = vmatprep.subr.mxu0 0.0
    %1052 = vmatpush1.msra.mxu0 0.0
    %1053 = vmatprep.mubr.f32.mxu0 0.0
    %1054 = vmatmul.mubr.f32.gmra.mrb[0].mxu0 %v238
    %v1055 = vpop.f32.mrb[0].mxu0
    %v1056 = vadd.f32 %v915, %v1055
    %v1057 = vpop.f32.mrb[0].mxu0
    %1058 = vdwg.mxu0
    %v1059 = vld [vmem:[%s10] sm:$0x7]
    %v1061 = vlaneseq
    %v1062 = vshrl.u32 %v1061, 7
    %v1063 = vsub.s32 0, %v1062
    %v1064 = vrot.slane %v1059, %v1063
    %v1065 = vlaneseq
    %v1066 = vshrl.u32 %v1065, 7
    %v1067 = vsub.s32 1, %v1066
    %v1068 = vrot.slane %v1059, %v1067
    %v1069 = vlaneseq
    %v1070 = vshrl.u32 %v1069, 7
    %v1071 = vsub.s32 2, %v1070
    %v1072 = vrot.slane %v1059, %v1071
    %v1076 = vadd.f32 %v985, %v1064
    %v1077 = vadd.f32 %v987, %v1068
    %v1078 = vadd.f32 %v1056, %v1072
    %v1079 = vld [vmem:[#allocation14] sm:$0xff]
    %v1080 = vld [vmem:[#allocation14 + $0x8] sm:$0xff]
    %v1081 = vld [vmem:[#allocation14 + $0x10] sm:$0xff]
    %v1082 = vld [vmem:[#allocation14 + $0x18] sm:$0xff]
    %v1083 = vld [vmem:[#allocation14 + $0x20] sm:$0xff]
    %v1084 = vld [vmem:[#allocation14 + $0x28] sm:$0xff]
    %v1085 = vld [vmem:[#allocation14 + $0x30] sm:$0xff]
    %v1086 = vld [vmem:[#allocation14 + $0x38] sm:$0xff]
    %v1087 = vld [vmem:[#allocation14 + $0x40] sm:$0xff]
    %v1088 = vld [vmem:[#allocation14 + $0x48] sm:$0xff]
    %v1089 = vld [vmem:[#allocation14 + $0x50] sm:$0xff]
    %v1090 = vld [vmem:[#allocation14 + $0x58] sm:$0xff]
    %v1091 = vld [vmem:[#allocation14 + $0x60] sm:$0xff]
    %v1092 = vld [vmem:[#allocation14 + $0x68] sm:$0xff]
    %v1093 = vld [vmem:[#allocation14 + $0x70] sm:$0xff]
    %v1094 = vld [vmem:[#allocation14 + $0x78] sm:$0xff]
    %v1095 = vld [vmem:[#allocation14 + $0x80] sm:$0xff]
    %v1096 = vld [vmem:[#allocation14 + $0x88] sm:$0xff]
    %v1097 = vld [vmem:[#allocation14 + $0x90] sm:$0xff]
    %v1098 = vld [vmem:[#allocation14 + $0x98] sm:$0xff]
    %v1099 = vld [vmem:[#allocation14 + $0xa0] sm:$0xff]
    %v1100 = vld [vmem:[#allocation14 + $0xa8] sm:$0xff]
    %v1101 = vld [vmem:[#allocation14 + $0xb0] sm:$0xff]
    %v1102 = vld [vmem:[#allocation14 + $0xb8] sm:$0xff]
    %v1103 = vld [vmem:[#allocation14 + $0xc0] sm:$0xff]
    %v1104 = vld [vmem:[#allocation14 + $0xc8] sm:$0xff]
    %v1105 = vld [vmem:[#allocation14 + $0xd0] sm:$0xff]
    %v1106 = vld [vmem:[#allocation14 + $0xd8] sm:$0xff]
    %v1107 = vld [vmem:[#allocation14 + $0xe0] sm:$0xff]
    %v1108 = vld [vmem:[#allocation14 + $0xe8] sm:$0xff]
    %v1109 = vld [vmem:[#allocation14 + $0xf0] sm:$0xff]
    %v1110 = vld [vmem:[#allocation14 + $0xf8] sm:$0xff]
    %v1111 = vld [vmem:[#allocation14 + $0x100] sm:$0xff]
    %v1112 = vld [vmem:[#allocation14 + $0x108] sm:$0xff]
    %v1113 = vld [vmem:[#allocation14 + $0x110] sm:$0xff]
    %v1114 = vld [vmem:[#allocation14 + $0x118] sm:$0xff]
    %v1115 = vld [vmem:[#allocation14 + $0x120] sm:$0xff]
    %v1116 = vld [vmem:[#allocation14 + $0x128] sm:$0xff]
    %v1117 = vld [vmem:[#allocation14 + $0x130] sm:$0xff]
    %v1118 = vld [vmem:[#allocation14 + $0x138] sm:$0xff]
    %v1119 = vld [vmem:[#allocation14 + $0x140] sm:$0xff]
    %v1120 = vld [vmem:[#allocation14 + $0x148] sm:$0xff]
    %v1121 = vld [vmem:[#allocation14 + $0x150] sm:$0xff]
    %v1122 = vld [vmem:[#allocation14 + $0x158] sm:$0xff]
    %v1123 = vld [vmem:[#allocation14 + $0x160] sm:$0xff]
    %v1124 = vld [vmem:[#allocation14 + $0x168] sm:$0xff]
    %v1125 = vld [vmem:[#allocation14 + $0x170] sm:$0xff]
    %v1126 = vld [vmem:[#allocation14 + $0x178] sm:$0xff]
    %v1127 = vld [vmem:[%s11] sm:$0x7]
    %v1129 = vlaneseq
    %v1130 = vshrl.u32 %v1129, 7
    %v1131 = vsub.s32 0, %v1130
    %v1132 = vrot.slane %v1127, %v1131
    %v1133 = vlaneseq
    %v1134 = vshrl.u32 %v1133, 7
    %v1135 = vsub.s32 1, %v1134
    %v1136 = vrot.slane %v1127, %v1135
    %v1137 = vlaneseq
    %v1138 = vshrl.u32 %v1137, 7
    %v1139 = vsub.s32 2, %v1138
    %v1140 = vrot.slane %v1127, %v1139
    %1144 = vmatprep.subr.mxu0 %v1080
    %1145 = vmatpush1.msra.mxu0 %v1079
    %1146 = vmatprep.subr.mxu0 %v1083
    %1147 = vmatpush1.msra.mxu0 %v1082
    %1148 = vmatprep.subr.mxu0 %v1086
    %1149 = vmatpush1.msra.mxu0 %v1085
    %1150 = vmatprep.subr.mxu0 %v1089
    %1151 = vmatpush1.msra.mxu0 %v1088
    %1152 = vmatprep.subr.mxu0 %v1092
    %1153 = vmatpush1.msra.mxu0 %v1091
    %1154 = vmatprep.subr.mxu0 %v1095
    %1155 = vmatpush1.msra.mxu0 %v1094
    %1156 = vmatprep.subr.mxu0 %v1098
    %1157 = vmatpush1.msra.mxu0 %v1097
    %1158 = vmatprep.subr.mxu0 %v1101
    %1159 = vmatpush1.msra.mxu0 %v1100
    %1160 = vmatprep.subr.mxu0 %v1104
    %1161 = vmatpush1.msra.mxu0 %v1103
    %1162 = vmatprep.subr.mxu0 %v1107
    %1163 = vmatpush1.msra.mxu0 %v1106
    %1164 = vmatprep.subr.mxu0 %v1110
    %1165 = vmatpush1.msra.mxu0 %v1109
    %1166 = vmatprep.subr.mxu0 %v1113
    %1167 = vmatpush1.msra.mxu0 %v1112
    %1168 = vmatprep.subr.mxu0 %v1116
    %1169 = vmatpush1.msra.mxu0 %v1115
    %1170 = vmatprep.subr.mxu0 %v1119
    %1171 = vmatpush1.msra.mxu0 %v1118
    %1172 = vmatprep.subr.mxu0 %v1122
    %1173 = vmatpush1.msra.mxu0 %v1121
    %1174 = vmatprep.subr.mxu0 %v1125
    %1175 = vmatpush1.msra.mxu0 %v1124
    %1176 = vmatprep.subr.mxu0 0.0
    %1177 = vmatpush1.msra.mxu0 0.0
    %1178 = vmatprep.subr.mxu0 0.0
    %1179 = vmatpush1.msra.mxu0 0.0
    %1180 = vmatprep.subr.mxu0 0.0
    %1181 = vmatpush1.msra.mxu0 0.0
    %1182 = vmatprep.subr.mxu0 0.0
    %1183 = vmatpush1.msra.mxu0 0.0
    %1184 = vmatprep.subr.mxu0 0.0
    %1185 = vmatpush1.msra.mxu0 0.0
    %1186 = vmatprep.subr.mxu0 0.0
    %1187 = vmatpush1.msra.mxu0 0.0
    %1188 = vmatprep.subr.mxu0 0.0
    %1189 = vmatpush1.msra.mxu0 0.0
    %1190 = vmatprep.subr.mxu0 0.0
    %1191 = vmatpush1.msra.mxu0 0.0
    %1192 = vmatprep.subr.mxu0 0.0
    %1193 = vmatpush1.msra.mxu0 0.0
    %1194 = vmatprep.subr.mxu0 0.0
    %1195 = vmatpush1.msra.mxu0 0.0
    %1196 = vmatprep.subr.mxu0 0.0
    %1197 = vmatpush1.msra.mxu0 0.0
    %1198 = vmatprep.subr.mxu0 0.0
    %1199 = vmatpush1.msra.mxu0 0.0
    %1200 = vmatprep.subr.mxu0 0.0
    %1201 = vmatpush1.msra.mxu0 0.0
    %1202 = vmatprep.subr.mxu0 0.0
    %1203 = vmatpush1.msra.mxu0 0.0
    %1204 = vmatprep.subr.mxu0 0.0
    %1205 = vmatpush1.msra.mxu0 0.0
    %1206 = vmatprep.subr.mxu0 0.0
    %1207 = vmatpush1.msra.mxu0 0.0
    %1208 = vmatprep.mubr.f32.mxu0 0.0
    %1209 = vmatmul.mubr.f32.gmra.mrb[0].mxu0 %v235
    %v1210 = vpop.f32.mrb[0].mxu0
    %v1211 = vadd.f32 %v1132, %v1210
    %v1212 = vpop.f32.mrb[0].mxu0
    %v1213 = vadd.f32 %v1136, %v1212
    %1214 = vdwg.mxu0
    %1215 = vmatprep.subr.mxu0 0.0
    %1216 = vmatpush1.msra.mxu0 %v1081
    %1217 = vmatprep.subr.mxu0 0.0
    %1218 = vmatpush1.msra.mxu0 %v1084
    %1219 = vmatprep.subr.mxu0 0.0
    %1220 = vmatpush1.msra.mxu0 %v1087
    %1221 = vmatprep.subr.mxu0 0.0
    %1222 = vmatpush1.msra.mxu0 %v1090
    %1223 = vmatprep.subr.mxu0 0.0
    %1224 = vmatpush1.msra.mxu0 %v1093
    %1225 = vmatprep.subr.mxu0 0.0
    %1226 = vmatpush1.msra.mxu0 %v1096
    %1227 = vmatprep.subr.mxu0 0.0
    %1228 = vmatpush1.msra.mxu0 %v1099
    %1229 = vmatprep.subr.mxu0 0.0
    %1230 = vmatpush1.msra.mxu0 %v1102
    %1231 = vmatprep.subr.mxu0 0.0
    %1232 = vmatpush1.msra.mxu0 %v1105
    %1233 = vmatprep.subr.mxu0 0.0
    %1234 = vmatpush1.msra.mxu0 %v1108
    %1235 = vmatprep.subr.mxu0 0.0
    %1236 = vmatpush1.msra.mxu0 %v1111
    %1237 = vmatprep.subr.mxu0 0.0
    %1238 = vmatpush1.msra.mxu0 %v1114
    %1239 = vmatprep.subr.mxu0 0.0
    %1240 = vmatpush1.msra.mxu0 %v1117
    %1241 = vmatprep.subr.mxu0 0.0
    %1242 = vmatpush1.msra.mxu0 %v1120
    %1243 = vmatprep.subr.mxu0 0.0
    %1244 = vmatpush1.msra.mxu0 %v1123
    %1245 = vmatprep.subr.mxu0 0.0
    %1246 = vmatpush1.msra.mxu0 %v1126
    %1247 = vmatprep.subr.mxu0 0.0
    %1248 = vmatpush1.msra.mxu0 0.0
    %1249 = vmatprep.subr.mxu0 0.0
    %1250 = vmatpush1.msra.mxu0 0.0
    %1251 = vmatprep.subr.mxu0 0.0
    %1252 = vmatpush1.msra.mxu0 0.0
    %1253 = vmatprep.subr.mxu0 0.0
    %1254 = vmatpush1.msra.mxu0 0.0
    %1255 = vmatprep.subr.mxu0 0.0
    %1256 = vmatpush1.msra.mxu0 0.0
    %1257 = vmatprep.subr.mxu0 0.0
    %1258 = vmatpush1.msra.mxu0 0.0
    %1259 = vmatprep.subr.mxu0 0.0
    %1260 = vmatpush1.msra.mxu0 0.0
    %1261 = vmatprep.subr.mxu0 0.0
    %1262 = vmatpush1.msra.mxu0 0.0
    %1263 = vmatprep.subr.mxu0 0.0
    %1264 = vmatpush1.msra.mxu0 0.0
    %1265 = vmatprep.subr.mxu0 0.0
    %1266 = vmatpush1.msra.mxu0 0.0
    %1267 = vmatprep.subr.mxu0 0.0
    %1268 = vmatpush1.msra.mxu0 0.0
    %1269 = vmatprep.subr.mxu0 0.0
    %1270 = vmatpush1.msra.mxu0 0.0
    %1271 = vmatprep.subr.mxu0 0.0
    %1272 = vmatpush1.msra.mxu0 0.0
    %1273 = vmatprep.subr.mxu0 0.0
    %1274 = vmatpush1.msra.mxu0 0.0
    %1275 = vmatprep.subr.mxu0 0.0
    %1276 = vmatpush1.msra.mxu0 0.0
    %1277 = vmatprep.subr.mxu0 0.0
    %1278 = vmatpush1.msra.mxu0 0.0
    %1279 = vmatprep.mubr.f32.mxu0 0.0
    %1280 = vmatmul.mubr.f32.gmra.mrb[0].mxu0 %v235
    %v1281 = vpop.f32.mrb[0].mxu0
    %v1282 = vadd.f32 %v1140, %v1281
    %v1283 = vpop.f32.mrb[0].mxu0
    %1284 = vdwg.mxu0
    %v1285 = vadd.f32 %v1076, %v1211
    %v1286 = vxor.u32 %v1285, 2147483648
    %v1287 = vmul.f32 %v1286, 1.442695
    %v1288 = vpow.pop %v1287
    %v1289 = vadd.f32 %v1288, 1.0
    %v1290 = vrcp.pop %v1289
    %v1291 = vmul.f32 1.0, %v1290
    %v1292 = vadd.f32 %v1077, %v1213
    %v1293 = vxor.u32 %v1292, 2147483648
    %v1294 = vmul.f32 %v1293, 1.442695
    %v1295 = vpow.pop %v1294
    %v1296 = vadd.f32 %v1295, 1.0
    %v1297 = vrcp.pop %v1296
    %v1298 = vmul.f32 1.0, %v1297
    %v1299 = vmul.f32 %v1291, %v1282
    %v1300 = vadd.f32 %v1078, %v1299
    %v1301 = vtanh.pop %v1300
    %v1302 = vsub.f32 1.0, %v1298
    %v1303 = vmul.f32 %v1302, %v1301
    %v1304 = vmul.f32 %v1298, %v235
    %v1305 = vadd.f32 %v1303, %v1304
    %v1306 = vld [vmem:[#allocation16] sm:$0xff]
    %v1307 = vld [vmem:[#allocation16 + $0x8] sm:$0xff]
    %v1308 = vld [vmem:[#allocation16 + $0x10] sm:$0xff]
    %v1309 = vld [vmem:[#allocation16 + $0x18] sm:$0xff]
    %v1310 = vld [vmem:[#allocation16 + $0x20] sm:$0xff]
    %v1311 = vld [vmem:[#allocation16 + $0x28] sm:$0xff]
    %v1312 = vld [vmem:[#allocation16 + $0x30] sm:$0xff]
    %v1313 = vld [vmem:[#allocation16 + $0x38] sm:$0xff]
    %v1314 = vld [vmem:[#allocation16 + $0x40] sm:$0xff]
    %v1315 = vld [vmem:[#allocation16 + $0x48] sm:$0xff]
    %v1316 = vld [vmem:[#allocation16 + $0x50] sm:$0xff]
    %v1317 = vld [vmem:[#allocation16 + $0x58] sm:$0xff]
    %v1318 = vld [vmem:[#allocation16 + $0x60] sm:$0xff]
    %v1319 = vld [vmem:[#allocation16 + $0x68] sm:$0xff]
    %v1320 = vld [vmem:[#allocation16 + $0x70] sm:$0xff]
    %v1321 = vld [vmem:[#allocation16 + $0x78] sm:$0xff]
    %v1322 = vld [vmem:[#allocation16 + $0x80] sm:$0xff]
    %v1323 = vld [vmem:[#allocation16 + $0x88] sm:$0xff]
    %v1324 = vld [vmem:[#allocation16 + $0x90] sm:$0xff]
    %v1325 = vld [vmem:[#allocation16 + $0x98] sm:$0xff]
    %v1326 = vld [vmem:[#allocation16 + $0xa0] sm:$0xff]
    %v1327 = vld [vmem:[#allocation16 + $0xa8] sm:$0xff]
    %v1328 = vld [vmem:[#allocation16 + $0xb0] sm:$0xff]
    %v1329 = vld [vmem:[#allocation16 + $0xb8] sm:$0xff]
    %v1330 = vld [vmem:[#allocation16 + $0xc0] sm:$0xff]
    %v1331 = vld [vmem:[#allocation16 + $0xc8] sm:$0xff]
    %v1332 = vld [vmem:[#allocation16 + $0xd0] sm:$0xff]
    %v1333 = vld [vmem:[#allocation16 + $0xd8] sm:$0xff]
    %v1334 = vld [vmem:[#allocation16 + $0xe0] sm:$0xff]
    %v1335 = vld [vmem:[#allocation16 + $0xe8] sm:$0xff]
    %v1336 = vld [vmem:[#allocation16 + $0xf0] sm:$0xff]
    %v1337 = vld [vmem:[#allocation16 + $0xf8] sm:$0xff]
    %v1338 = vld [vmem:[#allocation16 + $0x100] sm:$0xff]
    %v1339 = vld [vmem:[#allocation16 + $0x108] sm:$0xff]
    %v1340 = vld [vmem:[#allocation16 + $0x110] sm:$0xff]
    %v1341 = vld [vmem:[#allocation16 + $0x118] sm:$0xff]
    %v1342 = vld [vmem:[#allocation16 + $0x120] sm:$0xff]
    %v1343 = vld [vmem:[#allocation16 + $0x128] sm:$0xff]
    %v1344 = vld [vmem:[#allocation16 + $0x130] sm:$0xff]
    %v1345 = vld [vmem:[#allocation16 + $0x138] sm:$0xff]
    %v1346 = vld [vmem:[#allocation16 + $0x140] sm:$0xff]
    %v1347 = vld [vmem:[#allocation16 + $0x148] sm:$0xff]
    %v1348 = vld [vmem:[#allocation16 + $0x150] sm:$0xff]
    %v1349 = vld [vmem:[#allocation16 + $0x158] sm:$0xff]
    %v1350 = vld [vmem:[#allocation16 + $0x160] sm:$0xff]
    %v1351 = vld [vmem:[#allocation16 + $0x168] sm:$0xff]
    %v1352 = vld [vmem:[#allocation16 + $0x170] sm:$0xff]
    %v1353 = vld [vmem:[#allocation16 + $0x178] sm:$0xff]
    %v1354 = vld [vmem:[%s14] sm:$0x7]
    %v1356 = vlaneseq
    %v1357 = vshrl.u32 %v1356, 7
    %v1358 = vsub.s32 0, %v1357
    %v1359 = vrot.slane %v1354, %v1358
    %v1360 = vlaneseq
    %v1361 = vshrl.u32 %v1360, 7
    %v1362 = vsub.s32 1, %v1361
    %v1363 = vrot.slane %v1354, %v1362
    %v1364 = vlaneseq
    %v1365 = vshrl.u32 %v1364, 7
    %v1366 = vsub.s32 2, %v1365
    %v1367 = vrot.slane %v1354, %v1366
    %1371 = vmatprep.subr.mxu0 %v1307
    %1372 = vmatpush1.msra.mxu0 %v1306
    %1373 = vmatprep.subr.mxu0 %v1310
    %1374 = vmatpush1.msra.mxu0 %v1309
    %1375 = vmatprep.subr.mxu0 %v1313
    %1376 = vmatpush1.msra.mxu0 %v1312
    %1377 = vmatprep.subr.mxu0 %v1316
    %1378 = vmatpush1.msra.mxu0 %v1315
    %1379 = vmatprep.subr.mxu0 %v1319
    %1380 = vmatpush1.msra.mxu0 %v1318
    %1381 = vmatprep.subr.mxu0 %v1322
    %1382 = vmatpush1.msra.mxu0 %v1321
    %1383 = vmatprep.subr.mxu0 %v1325
    %1384 = vmatpush1.msra.mxu0 %v1324
    %1385 = vmatprep.subr.mxu0 %v1328
    %1386 = vmatpush1.msra.mxu0 %v1327
    %1387 = vmatprep.subr.mxu0 %v1331
    %1388 = vmatpush1.msra.mxu0 %v1330
    %1389 = vmatprep.subr.mxu0 %v1334
    %1390 = vmatpush1.msra.mxu0 %v1333
    %1391 = vmatprep.subr.mxu0 %v1337
    %1392 = vmatpush1.msra.mxu0 %v1336
    %1393 = vmatprep.subr.mxu0 %v1340
    %1394 = vmatpush1.msra.mxu0 %v1339
    %1395 = vmatprep.subr.mxu0 %v1343
    %1396 = vmatpush1.msra.mxu0 %v1342
    %1397 = vmatprep.subr.mxu0 %v1346
    %1398 = vmatpush1.msra.mxu0 %v1345
    %1399 = vmatprep.subr.mxu0 %v1349
    %1400 = vmatpush1.msra.mxu0 %v1348
    %1401 = vmatprep.subr.mxu0 %v1352
    %1402 = vmatpush1.msra.mxu0 %v1351
    %1403 = vmatprep.subr.mxu0 0.0
    %1404 = vmatpush1.msra.mxu0 0.0
    %1405 = vmatprep.subr.mxu0 0.0
    %1406 = vmatpush1.msra.mxu0 0.0
    %1407 = vmatprep.subr.mxu0 0.0
    %1408 = vmatpush1.msra.mxu0 0.0
    %1409 = vmatprep.subr.mxu0 0.0
    %1410 = vmatpush1.msra.mxu0 0.0
    %1411 = vmatprep.subr.mxu0 0.0
    %1412 = vmatpush1.msra.mxu0 0.0
    %1413 = vmatprep.subr.mxu0 0.0
    %1414 = vmatpush1.msra.mxu0 0.0
    %1415 = vmatprep.subr.mxu0 0.0
    %1416 = vmatpush1.msra.mxu0 0.0
    %1417 = vmatprep.subr.mxu0 0.0
    %1418 = vmatpush1.msra.mxu0 0.0
    %1419 = vmatprep.subr.mxu0 0.0
    %1420 = vmatpush1.msra.mxu0 0.0
    %1421 = vmatprep.subr.mxu0 0.0
    %1422 = vmatpush1.msra.mxu0 0.0
    %1423 = vmatprep.subr.mxu0 0.0
    %1424 = vmatpush1.msra.mxu0 0.0
    %1425 = vmatprep.subr.mxu0 0.0
    %1426 = vmatpush1.msra.mxu0 0.0
    %1427 = vmatprep.subr.mxu0 0.0
    %1428 = vmatpush1.msra.mxu0 0.0
    %1429 = vmatprep.subr.mxu0 0.0
    %1430 = vmatpush1.msra.mxu0 0.0
    %1431 = vmatprep.subr.mxu0 0.0
    %1432 = vmatpush1.msra.mxu0 0.0
    %1433 = vmatprep.subr.mxu0 0.0
    %1434 = vmatpush1.msra.mxu0 0.0
    %1435 = vmatprep.mubr.f32.mxu0 0.0
    %1436 = vmatmul.mubr.f32.gmra.mrb[0].mxu0 %v1305
    %v1437 = vpop.f32.mrb[0].mxu0
    %v1438 = vadd.f32 %v1359, %v1437
    %v1439 = vpop.f32.mrb[0].mxu0
    %v1440 = vadd.f32 %v1363, %v1439
    %1441 = vdwg.mxu0
    %1442 = vmatprep.subr.mxu0 0.0
    %1443 = vmatpush1.msra.mxu0 %v1308
    %1444 = vmatprep.subr.mxu0 0.0
    %1445 = vmatpush1.msra.mxu0 %v1311
    %1446 = vmatprep.subr.mxu0 0.0
    %1447 = vmatpush1.msra.mxu0 %v1314
    %1448 = vmatprep.subr.mxu0 0.0
    %1449 = vmatpush1.msra.mxu0 %v1317
    %1450 = vmatprep.subr.mxu0 0.0
    %1451 = vmatpush1.msra.mxu0 %v1320
    %1452 = vmatprep.subr.mxu0 0.0
    %1453 = vmatpush1.msra.mxu0 %v1323
    %1454 = vmatprep.subr.mxu0 0.0
    %1455 = vmatpush1.msra.mxu0 %v1326
    %1456 = vmatprep.subr.mxu0 0.0
    %1457 = vmatpush1.msra.mxu0 %v1329
    %1458 = vmatprep.subr.mxu0 0.0
    %1459 = vmatpush1.msra.mxu0 %v1332
    %1460 = vmatprep.subr.mxu0 0.0
    %1461 = vmatpush1.msra.mxu0 %v1335
    %1462 = vmatprep.subr.mxu0 0.0
    %1463 = vmatpush1.msra.mxu0 %v1338
    %1464 = vmatprep.subr.mxu0 0.0
    %1465 = vmatpush1.msra.mxu0 %v1341
    %1466 = vmatprep.subr.mxu0 0.0
    %1467 = vmatpush1.msra.mxu0 %v1344
    %1468 = vmatprep.subr.mxu0 0.0
    %1469 = vmatpush1.msra.mxu0 %v1347
    %1470 = vmatprep.subr.mxu0 0.0
    %1471 = vmatpush1.msra.mxu0 %v1350
    %1472 = vmatprep.subr.mxu0 0.0
    %1473 = vmatpush1.msra.mxu0 %v1353
    %1474 = vmatprep.subr.mxu0 0.0
    %1475 = vmatpush1.msra.mxu0 0.0
    %1476 = vmatprep.subr.mxu0 0.0
    %1477 = vmatpush1.msra.mxu0 0.0
    %1478 = vmatprep.subr.mxu0 0.0
    %1479 = vmatpush1.msra.mxu0 0.0
    %1480 = vmatprep.subr.mxu0 0.0
    %1481 = vmatpush1.msra.mxu0 0.0
    %1482 = vmatprep.subr.mxu0 0.0
    %1483 = vmatpush1.msra.mxu0 0.0
    %1484 = vmatprep.subr.mxu0 0.0
    %1485 = vmatpush1.msra.mxu0 0.0
    %1486 = vmatprep.subr.mxu0 0.0
    %1487 = vmatpush1.msra.mxu0 0.0
    %1488 = vmatprep.subr.mxu0 0.0
    %1489 = vmatpush1.msra.mxu0 0.0
    %1490 = vmatprep.subr.mxu0 0.0
    %1491 = vmatpush1.msra.mxu0 0.0
    %1492 = vmatprep.subr.mxu0 0.0
    %1493 = vmatpush1.msra.mxu0 0.0
    %1494 = vmatprep.subr.mxu0 0.0
    %1495 = vmatpush1.msra.mxu0 0.0
    %1496 = vmatprep.subr.mxu0 0.0
    %1497 = vmatpush1.msra.mxu0 0.0
    %1498 = vmatprep.subr.mxu0 0.0
    %1499 = vmatpush1.msra.mxu0 0.0
    %1500 = vmatprep.subr.mxu0 0.0
    %1501 = vmatpush1.msra.mxu0 0.0
    %1502 = vmatprep.subr.mxu0 0.0
    %1503 = vmatpush1.msra.mxu0 0.0
    %1504 = vmatprep.subr.mxu0 0.0
    %1505 = vmatpush1.msra.mxu0 0.0
    %1506 = vmatprep.mubr.f32.mxu0 0.0
    %1507 = vmatmul.mubr.f32.gmra.mrb[0].mxu0 %v1305
    %v1508 = vpop.f32.mrb[0].mxu0
    %v1509 = vadd.f32 %v1367, %v1508
    %v1510 = vpop.f32.mrb[0].mxu0
    %1511 = vdwg.mxu0
    %v1512 = vld [vmem:[#allocation17] sm:$0xff]
    %v1513 = vld [vmem:[#allocation17 + $0x8] sm:$0xff]
    %v1514 = vld [vmem:[#allocation17 + $0x10] sm:$0xff]
    %v1515 = vld [vmem:[#allocation17 + $0x18] sm:$0xff]
    %v1516 = vld [vmem:[#allocation17 + $0x20] sm:$0xff]
    %v1517 = vld [vmem:[#allocation17 + $0x28] sm:$0xff]
    %v1518 = vld [vmem:[#allocation17 + $0x30] sm:$0xff]
    %v1519 = vld [vmem:[#allocation17 + $0x38] sm:$0xff]
    %v1520 = vld [vmem:[#allocation17 + $0x40] sm:$0xff]
    %v1521 = vld [vmem:[#allocation17 + $0x48] sm:$0xff]
    %v1522 = vld [vmem:[#allocation17 + $0x50] sm:$0xff]
    %v1523 = vld [vmem:[#allocation17 + $0x58] sm:$0xff]
    %v1524 = vld [vmem:[#allocation17 + $0x60] sm:$0xff]
    %v1525 = vld [vmem:[#allocation17 + $0x68] sm:$0xff]
    %v1526 = vld [vmem:[#allocation17 + $0x70] sm:$0xff]
    %v1527 = vld [vmem:[#allocation17 + $0x78] sm:$0xff]
    %v1528 = vld [vmem:[#allocation17 + $0x80] sm:$0xff]
    %v1529 = vld [vmem:[#allocation17 + $0x88] sm:$0xff]
    %v1530 = vld [vmem:[#allocation17 + $0x90] sm:$0xff]
    %v1531 = vld [vmem:[#allocation17 + $0x98] sm:$0xff]
    %v1532 = vld [vmem:[#allocation17 + $0xa0] sm:$0xff]
    %v1533 = vld [vmem:[#allocation17 + $0xa8] sm:$0xff]
    %v1534 = vld [vmem:[#allocation17 + $0xb0] sm:$0xff]
    %v1535 = vld [vmem:[#allocation17 + $0xb8] sm:$0xff]
    %v1536 = vld [vmem:[#allocation17 + $0xc0] sm:$0xff]
    %v1537 = vld [vmem:[#allocation17 + $0xc8] sm:$0xff]
    %v1538 = vld [vmem:[#allocation17 + $0xd0] sm:$0xff]
    %v1539 = vld [vmem:[#allocation17 + $0xd8] sm:$0xff]
    %v1540 = vld [vmem:[#allocation17 + $0xe0] sm:$0xff]
    %v1541 = vld [vmem:[#allocation17 + $0xe8] sm:$0xff]
    %v1542 = vld [vmem:[#allocation17 + $0xf0] sm:$0xff]
    %v1543 = vld [vmem:[#allocation17 + $0xf8] sm:$0xff]
    %v1544 = vld [vmem:[#allocation17 + $0x100] sm:$0xff]
    %v1545 = vld [vmem:[#allocation17 + $0x108] sm:$0xff]
    %v1546 = vld [vmem:[#allocation17 + $0x110] sm:$0xff]
    %v1547 = vld [vmem:[#allocation17 + $0x118] sm:$0xff]
    %v1548 = vld [vmem:[#allocation17 + $0x120] sm:$0xff]
    %v1549 = vld [vmem:[#allocation17 + $0x128] sm:$0xff]
    %v1550 = vld [vmem:[#allocation17 + $0x130] sm:$0xff]
    %v1551 = vld [vmem:[#allocation17 + $0x138] sm:$0xff]
    %v1552 = vld [vmem:[#allocation17 + $0x140] sm:$0xff]
    %v1553 = vld [vmem:[#allocation17 + $0x148] sm:$0xff]
    %v1554 = vld [vmem:[#allocation17 + $0x150] sm:$0xff]
    %v1555 = vld [vmem:[#allocation17 + $0x158] sm:$0xff]
    %v1556 = vld [vmem:[#allocation17 + $0x160] sm:$0xff]
    %v1557 = vld [vmem:[#allocation17 + $0x168] sm:$0xff]
    %v1558 = vld [vmem:[#allocation17 + $0x170] sm:$0xff]
    %v1559 = vld [vmem:[#allocation17 + $0x178] sm:$0xff]
    %v1560 = vld [vmem:[%s15] sm:$0x7]
    %v1562 = vlaneseq
    %v1563 = vshrl.u32 %v1562, 7
    %v1564 = vsub.s32 0, %v1563
    %v1565 = vrot.slane %v1560, %v1564
    %v1566 = vlaneseq
    %v1567 = vshrl.u32 %v1566, 7
    %v1568 = vsub.s32 1, %v1567
    %v1569 = vrot.slane %v1560, %v1568
    %v1570 = vlaneseq
    %v1571 = vshrl.u32 %v1570, 7
    %v1572 = vsub.s32 2, %v1571
    %v1573 = vrot.slane %v1560, %v1572
    %1577 = vmatprep.subr.mxu0 %v1513
    %1578 = vmatpush1.msra.mxu0 %v1512
    %1579 = vmatprep.subr.mxu0 %v1516
    %1580 = vmatpush1.msra.mxu0 %v1515
    %1581 = vmatprep.subr.mxu0 %v1519
    %1582 = vmatpush1.msra.mxu0 %v1518
    %1583 = vmatprep.subr.mxu0 %v1522
    %1584 = vmatpush1.msra.mxu0 %v1521
    %1585 = vmatprep.subr.mxu0 %v1525
    %1586 = vmatpush1.msra.mxu0 %v1524
    %1587 = vmatprep.subr.mxu0 %v1528
    %1588 = vmatpush1.msra.mxu0 %v1527
    %1589 = vmatprep.subr.mxu0 %v1531
    %1590 = vmatpush1.msra.mxu0 %v1530
    %1591 = vmatprep.subr.mxu0 %v1534
    %1592 = vmatpush1.msra.mxu0 %v1533
    %1593 = vmatprep.subr.mxu0 %v1537
    %1594 = vmatpush1.msra.mxu0 %v1536
    %1595 = vmatprep.subr.mxu0 %v1540
    %1596 = vmatpush1.msra.mxu0 %v1539
    %1597 = vmatprep.subr.mxu0 %v1543
    %1598 = vmatpush1.msra.mxu0 %v1542
    %1599 = vmatprep.subr.mxu0 %v1546
    %1600 = vmatpush1.msra.mxu0 %v1545
    %1601 = vmatprep.subr.mxu0 %v1549
    %1602 = vmatpush1.msra.mxu0 %v1548
    %1603 = vmatprep.subr.mxu0 %v1552
    %1604 = vmatpush1.msra.mxu0 %v1551
    %1605 = vmatprep.subr.mxu0 %v1555
    %1606 = vmatpush1.msra.mxu0 %v1554
    %1607 = vmatprep.subr.mxu0 %v1558
    %1608 = vmatpush1.msra.mxu0 %v1557
    %1609 = vmatprep.subr.mxu0 0.0
    %1610 = vmatpush1.msra.mxu0 0.0
    %1611 = vmatprep.subr.mxu0 0.0
    %1612 = vmatpush1.msra.mxu0 0.0
    %1613 = vmatprep.subr.mxu0 0.0
    %1614 = vmatpush1.msra.mxu0 0.0
    %1615 = vmatprep.subr.mxu0 0.0
    %1616 = vmatpush1.msra.mxu0 0.0
    %1617 = vmatprep.subr.mxu0 0.0
    %1618 = vmatpush1.msra.mxu0 0.0
    %1619 = vmatprep.subr.mxu0 0.0
    %1620 = vmatpush1.msra.mxu0 0.0
    %1621 = vmatprep.subr.mxu0 0.0
    %1622 = vmatpush1.msra.mxu0 0.0
    %1623 = vmatprep.subr.mxu0 0.0
    %1624 = vmatpush1.msra.mxu0 0.0
    %1625 = vmatprep.subr.mxu0 0.0
    %1626 = vmatpush1.msra.mxu0 0.0
    %1627 = vmatprep.subr.mxu0 0.0
    %1628 = vmatpush1.msra.mxu0 0.0
    %1629 = vmatprep.subr.mxu0 0.0
    %1630 = vmatpush1.msra.mxu0 0.0
    %1631 = vmatprep.subr.mxu0 0.0
    %1632 = vmatpush1.msra.mxu0 0.0
    %1633 = vmatprep.subr.mxu0 0.0
    %1634 = vmatpush1.msra.mxu0 0.0
    %1635 = vmatprep.subr.mxu0 0.0
    %1636 = vmatpush1.msra.mxu0 0.0
    %1637 = vmatprep.subr.mxu0 0.0
    %1638 = vmatpush1.msra.mxu0 0.0
    %1639 = vmatprep.subr.mxu0 0.0
    %1640 = vmatpush1.msra.mxu0 0.0
    %1641 = vmatprep.mubr.f32.mxu0 0.0
    %1642 = vmatmul.mubr.f32.gmra.mrb[0].mxu0 %v237
    %v1643 = vpop.f32.mrb[0].mxu0
    %v1644 = vadd.f32 %v1565, %v1643
    %v1645 = vpop.f32.mrb[0].mxu0
    %v1646 = vadd.f32 %v1569, %v1645
    %1647 = vdwg.mxu0
    %1648 = vmatprep.subr.mxu0 0.0
    %1649 = vmatpush1.msra.mxu0 %v1514
    %1650 = vmatprep.subr.mxu0 0.0
    %1651 = vmatpush1.msra.mxu0 %v1517
    %1652 = vmatprep.subr.mxu0 0.0
    %1653 = vmatpush1.msra.mxu0 %v1520
    %1654 = vmatprep.subr.mxu0 0.0
    %1655 = vmatpush1.msra.mxu0 %v1523
    %1656 = vmatprep.subr.mxu0 0.0
    %1657 = vmatpush1.msra.mxu0 %v1526
    %1658 = vmatprep.subr.mxu0 0.0
    %1659 = vmatpush1.msra.mxu0 %v1529
    %1660 = vmatprep.subr.mxu0 0.0
    %1661 = vmatpush1.msra.mxu0 %v1532
    %1662 = vmatprep.subr.mxu0 0.0
    %1663 = vmatpush1.msra.mxu0 %v1535
    %1664 = vmatprep.subr.mxu0 0.0
    %1665 = vmatpush1.msra.mxu0 %v1538
    %1666 = vmatprep.subr.mxu0 0.0
    %1667 = vmatpush1.msra.mxu0 %v1541
    %1668 = vmatprep.subr.mxu0 0.0
    %1669 = vmatpush1.msra.mxu0 %v1544
    %1670 = vmatprep.subr.mxu0 0.0
    %1671 = vmatpush1.msra.mxu0 %v1547
    %1672 = vmatprep.subr.mxu0 0.0
    %1673 = vmatpush1.msra.mxu0 %v1550
    %1674 = vmatprep.subr.mxu0 0.0
    %1675 = vmatpush1.msra.mxu0 %v1553
    %1676 = vmatprep.subr.mxu0 0.0
    %1677 = vmatpush1.msra.mxu0 %v1556
    %1678 = vmatprep.subr.mxu0 0.0
    %1679 = vmatpush1.msra.mxu0 %v1559
    %1680 = vmatprep.subr.mxu0 0.0
    %1681 = vmatpush1.msra.mxu0 0.0
    %1682 = vmatprep.subr.mxu0 0.0
    %1683 = vmatpush1.msra.mxu0 0.0
    %1684 = vmatprep.subr.mxu0 0.0
    %1685 = vmatpush1.msra.mxu0 0.0
    %1686 = vmatprep.subr.mxu0 0.0
    %1687 = vmatpush1.msra.mxu0 0.0
    %1688 = vmatprep.subr.mxu0 0.0
    %1689 = vmatpush1.msra.mxu0 0.0
    %1690 = vmatprep.subr.mxu0 0.0
    %1691 = vmatpush1.msra.mxu0 0.0
    %1692 = vmatprep.subr.mxu0 0.0
    %1693 = vmatpush1.msra.mxu0 0.0
    %1694 = vmatprep.subr.mxu0 0.0
    %1695 = vmatpush1.msra.mxu0 0.0
    %1696 = vmatprep.subr.mxu0 0.0
    %1697 = vmatpush1.msra.mxu0 0.0
    %1698 = vmatprep.subr.mxu0 0.0
    %1699 = vmatpush1.msra.mxu0 0.0
    %1700 = vmatprep.subr.mxu0 0.0
    %1701 = vmatpush1.msra.mxu0 0.0
    %1702 = vmatprep.subr.mxu0 0.0
    %1703 = vmatpush1.msra.mxu0 0.0
    %1704 = vmatprep.subr.mxu0 0.0
    %1705 = vmatpush1.msra.mxu0 0.0
    %1706 = vmatprep.subr.mxu0 0.0
    %1707 = vmatpush1.msra.mxu0 0.0
    %1708 = vmatprep.subr.mxu0 0.0
    %1709 = vmatpush1.msra.mxu0 0.0
    %1710 = vmatprep.subr.mxu0 0.0
    %1711 = vmatpush1.msra.mxu0 0.0
    %1712 = vmatprep.mubr.f32.mxu0 0.0
    %1713 = vmatmul.mubr.f32.gmra.mrb[0].mxu0 %v237
    %v1714 = vpop.f32.mrb[0].mxu0
    %v1715 = vadd.f32 %v1573, %v1714
    %v1716 = vpop.f32.mrb[0].mxu0
    %1717 = vdwg.mxu0
    %v1718 = vadd.f32 %v1438, %v1644
    %v1719 = vxor.u32 %v1718, 2147483648
    %v1720 = vmul.f32 %v1719, 1.442695
    %v1721 = vpow.pop %v1720
    %v1722 = vadd.f32 %v1721, 1.0
    %v1723 = vrcp.pop %v1722
    %v1724 = vmul.f32 1.0, %v1723
    %v1725 = vadd.f32 %v1440, %v1646
    %v1726 = vxor.u32 %v1725, 2147483648
    %v1727 = vmul.f32 %v1726, 1.442695
    %v1728 = vpow.pop %v1727
    %v1729 = vadd.f32 %v1728, 1.0
    %v1730 = vrcp.pop %v1729
    %v1731 = vmul.f32 1.0, %v1730
    %v1732 = vmul.f32 %v1724, %v1715
    %v1733 = vadd.f32 %v1509, %v1732
    %v1734 = vtanh.pop %v1733
    %v1735 = vsub.f32 1.0, %v1731
    %v1736 = vmul.f32 %v1735, %v1734
    %v1737 = vmul.f32 %v1731, %v237
    %v1738 = vadd.f32 %v1736, %v1737
    %v1739 = vld [vmem:[#allocation19] sm:$0xff]
    %v1740 = vld [vmem:[#allocation19 + $0x8] sm:$0xff]
    %v1741 = vld [vmem:[#allocation19 + $0x10] sm:$0xff]
    %v1742 = vld [vmem:[#allocation19 + $0x18] sm:$0xff]
    %v1743 = vld [vmem:[#allocation19 + $0x20] sm:$0xff]
    %v1744 = vld [vmem:[#allocation19 + $0x28] sm:$0xff]
    %v1745 = vld [vmem:[#allocation19 + $0x30] sm:$0xff]
    %v1746 = vld [vmem:[#allocation19 + $0x38] sm:$0xff]
    %v1747 = vld [vmem:[#allocation19 + $0x40] sm:$0xff]
    %v1748 = vld [vmem:[#allocation19 + $0x48] sm:$0xff]
    %v1749 = vld [vmem:[#allocation19 + $0x50] sm:$0xff]
    %v1750 = vld [vmem:[#allocation19 + $0x58] sm:$0xff]
    %v1751 = vld [vmem:[#allocation19 + $0x60] sm:$0xff]
    %v1752 = vld [vmem:[#allocation19 + $0x68] sm:$0xff]
    %v1753 = vld [vmem:[#allocation19 + $0x70] sm:$0xff]
    %v1754 = vld [vmem:[#allocation19 + $0x78] sm:$0xff]
    %v1755 = vld [vmem:[#allocation20] sm:$0xff]
    %v1756 = vld [vmem:[#allocation20 + $0x8] sm:$0xff]
    %v1757 = vld [vmem:[#allocation20 + $0x10] sm:$0xff]
    %v1758 = vld [vmem:[#allocation20 + $0x18] sm:$0xff]
    %v1759 = vld [vmem:[#allocation20 + $0x20] sm:$0xff]
    %v1760 = vld [vmem:[#allocation20 + $0x28] sm:$0xff]
    %v1761 = vld [vmem:[#allocation20 + $0x30] sm:$0xff]
    %v1762 = vld [vmem:[#allocation20 + $0x38] sm:$0xff]
    %v1763 = vld [vmem:[#allocation20 + $0x40] sm:$0xff]
    %v1764 = vld [vmem:[#allocation20 + $0x48] sm:$0xff]
    %v1765 = vld [vmem:[#allocation20 + $0x50] sm:$0xff]
    %v1766 = vld [vmem:[#allocation20 + $0x58] sm:$0xff]
    %v1767 = vld [vmem:[#allocation20 + $0x60] sm:$0xff]
    %v1768 = vld [vmem:[#allocation20 + $0x68] sm:$0xff]
    %v1769 = vld [vmem:[#allocation20 + $0x70] sm:$0xff]
    %v1770 = vld [vmem:[#allocation20 + $0x78] sm:$0xff]
    %1771 = vmatprep.subr.mxu0 0.0
    %1772 = vmatpush1.msra.mxu0 %v1755
    %1773 = vmatprep.subr.mxu0 0.0
    %1774 = vmatpush1.msra.mxu0 %v1756
    %1775 = vmatprep.subr.mxu0 0.0
    %1776 = vmatpush1.msra.mxu0 %v1757
    %1777 = vmatprep.subr.mxu0 0.0
    %1778 = vmatpush1.msra.mxu0 %v1758
    %1779 = vmatprep.subr.mxu0 0.0
    %1780 = vmatpush1.msra.mxu0 %v1759
    %1781 = vmatprep.subr.mxu0 0.0
    %1782 = vmatpush1.msra.mxu0 %v1760
    %1783 = vmatprep.subr.mxu0 0.0
    %1784 = vmatpush1.msra.mxu0 %v1761
    %1785 = vmatprep.subr.mxu0 0.0
    %1786 = vmatpush1.msra.mxu0 %v1762
    %1787 = vmatprep.subr.mxu0 0.0
    %1788 = vmatpush1.msra.mxu0 %v1763
    %1789 = vmatprep.subr.mxu0 0.0
    %1790 = vmatpush1.msra.mxu0 %v1764
    %1791 = vmatprep.subr.mxu0 0.0
    %1792 = vmatpush1.msra.mxu0 %v1765
    %1793 = vmatprep.subr.mxu0 0.0
    %1794 = vmatpush1.msra.mxu0 %v1766
    %1795 = vmatprep.subr.mxu0 0.0
    %1796 = vmatpush1.msra.mxu0 %v1767
    %1797 = vmatprep.subr.mxu0 0.0
    %1798 = vmatpush1.msra.mxu0 %v1768
    %1799 = vmatprep.subr.mxu0 0.0
    %1800 = vmatpush1.msra.mxu0 %v1769
    %1801 = vmatprep.subr.mxu0 0.0
    %1802 = vmatpush1.msra.mxu0 %v1770
    %1803 = vmatprep.subr.mxu0 0.0
    %1804 = vmatpush1.msra.mxu0 0.0
    %1805 = vmatprep.subr.mxu0 0.0
    %1806 = vmatpush1.msra.mxu0 0.0
    %1807 = vmatprep.subr.mxu0 0.0
    %1808 = vmatpush1.msra.mxu0 0.0
    %1809 = vmatprep.subr.mxu0 0.0
    %1810 = vmatpush1.msra.mxu0 0.0
    %1811 = vmatprep.subr.mxu0 0.0
    %1812 = vmatpush1.msra.mxu0 0.0
    %1813 = vmatprep.subr.mxu0 0.0
    %1814 = vmatpush1.msra.mxu0 0.0
    %1815 = vmatprep.subr.mxu0 0.0
    %1816 = vmatpush1.msra.mxu0 0.0
    %1817 = vmatprep.subr.mxu0 0.0
    %1818 = vmatpush1.msra.mxu0 0.0
    %1819 = vmatprep.subr.mxu0 0.0
    %1820 = vmatpush1.msra.mxu0 0.0
    %1821 = vmatprep.subr.mxu0 0.0
    %1822 = vmatpush1.msra.mxu0 0.0
    %1823 = vmatprep.subr.mxu0 0.0
    %1824 = vmatpush1.msra.mxu0 0.0
    %1825 = vmatprep.subr.mxu0 0.0
    %1826 = vmatpush1.msra.mxu0 0.0
    %1827 = vmatprep.subr.mxu0 0.0
    %1828 = vmatpush1.msra.mxu0 0.0
    %1829 = vmatprep.subr.mxu0 0.0
    %1830 = vmatpush1.msra.mxu0 0.0
    %1831 = vmatprep.subr.mxu0 0.0
    %1832 = vmatpush1.msra.mxu0 0.0
    %1833 = vmatprep.subr.mxu0 0.0
    %1834 = vmatpush1.msra.mxu0 0.0
    %1835 = vmatprep.mubr.f32.mxu0 0.0
    %1836 = vmatmul.mubr.f32.gmra.mrb[0].mxu0 %v775
    %v1837 = vpop.f32.mrb[0].mxu0
    %v1838 = vadd.f32 0.0, %v1837
    %v1839 = vpop.f32.mrb[0].mxu0
    %1840 = vdwg.mxu0
    %1841 = vmatprep.subr.mxu0 0.0
    %1842 = vmatpush1.msra.mxu0 %v1739
    %1843 = vmatprep.subr.mxu0 0.0
    %1844 = vmatpush1.msra.mxu0 %v1740
    %1845 = vmatprep.subr.mxu0 0.0
    %1846 = vmatpush1.msra.mxu0 %v1741
    %1847 = vmatprep.subr.mxu0 0.0
    %1848 = vmatpush1.msra.mxu0 %v1742
    %1849 = vmatprep.subr.mxu0 0.0
    %1850 = vmatpush1.msra.mxu0 %v1743
    %1851 = vmatprep.subr.mxu0 0.0
    %1852 = vmatpush1.msra.mxu0 %v1744
    %1853 = vmatprep.subr.mxu0 0.0
    %1854 = vmatpush1.msra.mxu0 %v1745
    %1855 = vmatprep.subr.mxu0 0.0
    %1856 = vmatpush1.msra.mxu0 %v1746
    %1857 = vmatprep.subr.mxu0 0.0
    %1858 = vmatpush1.msra.mxu0 %v1747
    %1859 = vmatprep.subr.mxu0 0.0
    %1860 = vmatpush1.msra.mxu0 %v1748
    %1861 = vmatprep.subr.mxu0 0.0
    %1862 = vmatpush1.msra.mxu0 %v1749
    %1863 = vmatprep.subr.mxu0 0.0
    %1864 = vmatpush1.msra.mxu0 %v1750
    %1865 = vmatprep.subr.mxu0 0.0
    %1866 = vmatpush1.msra.mxu0 %v1751
    %1867 = vmatprep.subr.mxu0 0.0
    %1868 = vmatpush1.msra.mxu0 %v1752
    %1869 = vmatprep.subr.mxu0 0.0
    %1870 = vmatpush1.msra.mxu0 %v1753
    %1871 = vmatprep.subr.mxu0 0.0
    %1872 = vmatpush1.msra.mxu0 %v1754
    %1873 = vmatprep.subr.mxu0 0.0
    %1874 = vmatpush1.msra.mxu0 0.0
    %1875 = vmatprep.subr.mxu0 0.0
    %1876 = vmatpush1.msra.mxu0 0.0
    %1877 = vmatprep.subr.mxu0 0.0
    %1878 = vmatpush1.msra.mxu0 0.0
    %1879 = vmatprep.subr.mxu0 0.0
    %1880 = vmatpush1.msra.mxu0 0.0
    %1881 = vmatprep.subr.mxu0 0.0
    %1882 = vmatpush1.msra.mxu0 0.0
    %1883 = vmatprep.subr.mxu0 0.0
    %1884 = vmatpush1.msra.mxu0 0.0
    %1885 = vmatprep.subr.mxu0 0.0
    %1886 = vmatpush1.msra.mxu0 0.0
    %1887 = vmatprep.subr.mxu0 0.0
    %1888 = vmatpush1.msra.mxu0 0.0
    %1889 = vmatprep.subr.mxu0 0.0
    %1890 = vmatpush1.msra.mxu0 0.0
    %1891 = vmatprep.subr.mxu0 0.0
    %1892 = vmatpush1.msra.mxu0 0.0
    %1893 = vmatprep.subr.mxu0 0.0
    %1894 = vmatpush1.msra.mxu0 0.0
    %1895 = vmatprep.subr.mxu0 0.0
    %1896 = vmatpush1.msra.mxu0 0.0
    %1897 = vmatprep.subr.mxu0 0.0
    %1898 = vmatpush1.msra.mxu0 0.0
    %1899 = vmatprep.subr.mxu0 0.0
    %1900 = vmatpush1.msra.mxu0 0.0
    %1901 = vmatprep.subr.mxu0 0.0
    %1902 = vmatpush1.msra.mxu0 0.0
    %1903 = vmatprep.subr.mxu0 0.0
    %1904 = vmatpush1.msra.mxu0 0.0
    %1905 = vmatprep.mubr.f32.mxu0 0.0
    %1906 = vmatmul.mubr.f32.gmra.mrb[0].mxu0 %v1738
    %v1907 = vpop.f32.mrb[0].mxu0
    %v1908 = vadd.f32 %v1838, %v1907
    %v1909 = vpop.f32.mrb[0].mxu0
    %1910 = vdwg.mxu0
    %v1911 = vld [vmem:[%s18] sm:$0x1]
    %v1913 = vlaneseq
    %v1914 = vshrl.u32 %v1913, 7
    %v1915 = vsub.s32 0, %v1914
    %v1916 = vrot.slane %v1911, %v1915
    %v1918 = vadd.f32 %v1908, %v1916
    %v1919 = vtanh.pop %v1918
    %1920 = vst [vmem:[#allocation22] sm:$0xff] %v1919
    %1921 = vst [vmem:[#allocation23] sm:$0xff] %v1305
    %1922 = vst [vmem:[%s236] sm:$0xff] %v1738
    // Predicated region
    $region130: #{tpu_custom_call.1} parent=1 // pred_check
      _
    $region131: #{tpu_custom_call.1} parent=1 // pred_check_branch
      %1924 = sbr.rel (0) target = $region133
    $region132: #{tpu_custom_call.1} parent=1 // pred_region
      %s1926 = ssub.s32 128, 128
      %1927 = vsyncadd [#allocation4], %s1926
      %s1929 = sshll.u32 [#allocation22], 4
      %s1930 = int_to_ptr.vmem [resolvable:$true] %s1929
      %1932 = dma.vmem_to_hbm [thread:$0]  %s1930, 128, %s19, [#allocation4]
    $region133: #{tpu_custom_call.1} parent=1 // pred_fallthru
      _
    // Predicated region
    $region134: #{tpu_custom_call.1} parent=1 // pred_check
      _
    $region135: #{tpu_custom_call.1} parent=1 // pred_check_branch
      %1934 = sbr.rel (0) target = $region137
    $region136: #{tpu_custom_call.1} parent=1 // pred_region
      %s1936 = ssub.s32 256, 256
      %1937 = vsyncadd [#allocation24], %s1936
      %s1938 = sshll.u32 [#allocation23], 4
      %s1939 = int_to_ptr.vmem [resolvable:$true] %s1938
      %1944 = dma.vmem_to_hbm [thread:$0]  %s1939, 256, %s20, [#allocation24], 128, 128, 8
    $region137: #{tpu_custom_call.1} parent=1 // pred_fallthru
      _
    // Predicated region
    $region138: #{tpu_custom_call.1} parent=1 // pred_check
      _
    $region139: #{tpu_custom_call.1} parent=1 // pred_check_branch
      %1946 = sbr.rel (0) target = $region141
    $region140: #{tpu_custom_call.1} parent=1 // pred_region
      %1947 = dma.done [#allocation4], 128
    $region141: #{tpu_custom_call.1} parent=1 // pred_fallthru
      _
    // Predicated region
    $region142: #{tpu_custom_call.1} parent=1 // pred_check
      _
    $region143: #{tpu_custom_call.1} parent=1 // pred_check_branch
      %1949 = sbr.rel (0) target = $region145
    $region144: #{tpu_custom_call.1} parent=1 // pred_region
      %1950 = dma.done [#allocation24], 256
    $region145: #{tpu_custom_call.1} parent=1 // pred_fallthru
      _
    %1951 = vsyncpa [#allocation3], 1
    %1952 = vsyncpa [#allocation6], 1
    %1953 = vsyncpa [#allocation9], 1
    %1954 = vsyncpa [#allocation12], 1
    %1955 = vsyncpa [#allocation15], 1
    %1956 = vsyncpa [#allocation18], 1
    %1957 = vsyncpa [#allocation21], 1
    %1958 = vsyncpa [#allocation4], 1
    %1959 = vsyncpa [#allocation24], 1

</llo_original>
